<compile_context>
chip_gen: v7x
topology: tpu7x:2x2x1
jax: 0.10.0
libtpu: 0.0.40
codegen_flags: <defaults>
</compile_context>

<pallas_src>
import functools

import jax
import jax.numpy as jnp
import numpy as np
from jax.experimental import pallas as pl
from jax.experimental.pallas import tpu as pltpu


# ---------------------------------------------------------------------------
# Fused kernel: one grid cell runs the full network forward for BB batches.
# Row layout: row = c*(BB*T) + b_local*T + t; features on the 128-lane axis.
# ---------------------------------------------------------------------------
def _fsmn_sele_net_kernel(x_ref, wf_ref, bf_ref,
                          wsh_ref, wmem_ref, wexp_ref, bexp_ref,
                          wd_ref, bd_ref, o_ref,
                          *, n_layers, C, T, BB, lorder, rorder, sele_layer,
                          Dproj, use_bf16):
    n_taps = lorder + rorder

    def mm(a, w):
        if use_bf16:
            a = a.astype(jnp.bfloat16)
            w = w.astype(jnp.bfloat16)
        return jnp.dot(a, w, preferred_element_type=jnp.float32)

    # featmap: relu(x @ Wf + bf) over every (c, b, t) row at once
    x = x_ref[0]                                                       # (C*BB*T, Din)
    h = jnp.maximum(mm(x, wf_ref[...]) + bf_ref[...], 0.0)             # (rows, Dlin)

    # Hoisted FIR masks (iota + mod + compares computed once per row count).
    def tap_masks(rows):
        t_idx = jax.lax.broadcasted_iota(jnp.int32, (rows, Dproj), 0) % T
        ms = []
        for s in range(n_taps):
            if s < lorder:
                d = lorder - 1 - s
                ms.append(None if d == 0 else (t_idx >= d))
            else:
                j = s - lorder + 1
                ms.append(t_idx < T - j)
        return ms

    rows_pre = C * BB * T
    rows_post = BB * T
    masks_pre = tap_masks(rows_pre)
    if C == 1:
        masks_post = masks_pre
    elif sele_layer < n_layers - 1:
        masks_post = tap_masks(rows_post)
    else:
        masks_post = None                      # no FIR layers run after pooling

    cur_rows = rows_pre
    masks = masks_pre
    for i in range(n_layers):
        wsh = wsh_ref[i]                       # (Dlin, Dproj)
        wmem = wmem_ref[i]                     # (n_taps, Dproj), identity folded in
        wexp = wexp_ref[i]                     # (Dproj, Dlin)
        bexp = bexp_ref[i]                     # (1, Dlin)

        # shrink (LinearTransform, no bias)
        p = mm(h, wsh)                         # (cur_rows, Dproj)

        # Fsmn memory: identity folded into the delay-0 tap weight; other taps
        # are sublane rolls (XLU) masked by the hoisted t_idx comparisons (VPU).
        m = p * wmem[lorder - 1:lorder, :]
        for s in range(n_taps):
            if s == lorder - 1:
                continue
            if s < lorder:
                d = lorder - 1 - s             # causal delay
                shifted = jnp.where(masks[s], pltpu.roll(p, shift=d, axis=0), 0.0)
            else:
                j = s - lorder + 1             # anti-causal lookahead
                shifted = jnp.where(masks[s],
                                    pltpu.roll(p, shift=cur_rows - j, axis=0), 0.0)
            m = m + shifted * wmem[s:s + 1, :]

        # expand (AffineTransform) + relu
        y = jnp.maximum(mm(m, wexp) + bexp, 0.0)                       # (cur_rows, Dlin)

        # channel selection: MaxPool2d((C,1)) == elementwise max of the C
        # contiguous, sublane-aligned (BB*T, Dlin) row blocks.
        if i == sele_layer and C > 1:
            pooled = y[0:rows_post, :]
            for c in range(1, C):
                pooled = jnp.maximum(pooled, y[c * rows_post:(c + 1) * rows_post, :])
            y = pooled
            cur_rows = rows_post
            masks = masks_post
        h = y

    # decision head (lane-dense: output padded to a multiple of 128 lanes)
    z = mm(h, wd_ref[...]) + bd_ref[...]
    o_ref[0] = z


# ---------------------------------------------------------------------------
# Batch-block selection: fold as many batches per grid step as VMEM allows,
# while keeping at least `min_grid` grid steps (2 TCs on v7x-class chips).
# ---------------------------------------------------------------------------
def _tensorcores_per_chip():
    try:
        kind = jax.devices()[0].device_kind.lower()
    except Exception:
        return 1
    return 2 if "v7" in kind else 1


def _pick_batch_block(B, rows_per_batch, *, min_grid, rows_cap=4096):
    best = 1
    for d in range(1, B + 1):
        if B % d:
            continue
        if d * rows_per_batch > rows_cap:
            break
        if d > 1 and (B // d) < min_grid:
            continue
        best = d
    return best


# ---------------------------------------------------------------------------
# Wrapper: one pallas_call over grid=(B // BB,), everything VMEM resident.
# ---------------------------------------------------------------------------
def fsmn_sele_net_v2_forward(x_btcf, params, *, lorder, rorder, sele_layer,
                             batch_block=None):
    """Full FSMNSeleNetV2 forward. Input (B, T, C, input_dim) -> (B, T, num_syn)."""
    B, T, C, Din = x_btcf.shape
    n_layers = len(params["layers"])
    assert 0 <= sele_layer < n_layers, "selection layer must be one of the FSMN units"
    Dlin = params["featmap"]["w"].shape[1]
    Dproj = params["layers"][0]["w_shrink"].shape[1]
    nsyn = params["decision"]["w"].shape[1]
    npad = max(128, ((nsyn + 127) // 128) * 128)      # lane-dense decision output
    n_taps = lorder + rorder

    if batch_block is None:
        batch_block = _pick_batch_block(B, C * T, min_grid=_tensorcores_per_chip())
    BB = batch_block
    assert B % BB == 0
    G = B // BB
    rows_pre = C * BB * T
    use_bf16 = rows_pre >= 512                        # only once the MXU matters

    # (B,T,C,F) -> rows ordered (c, b_local, t): row = c*(BB*T) + b_local*T + t.
    # Tiny one-time XLA transpose; buys sublane-aligned FIR shifts + pooling.
    x_cm = jnp.transpose(x_btcf, (2, 0, 1, 3))        # (C, B, T, Din)
    x_cm = x_cm.reshape(C, G, BB, T, Din).transpose(1, 0, 2, 3, 4)
    x_cm = x_cm.reshape(G, C * BB * T, Din)

    # Pack per-layer weights into 4 stacked arrays (fewer DMA descriptors).
    w_sh = jnp.stack([lp["w_shrink"] for lp in params["layers"]])       # (L,Dlin,Dproj)
    w_mem = jnp.stack([lp["w_mem"] for lp in params["layers"]])         # (L,taps,Dproj)
    w_mem = w_mem.at[:, lorder - 1, :].add(1.0)       # fold identity path into d==0 tap
    w_ex = jnp.stack([lp["w_expand"] for lp in params["layers"]])       # (L,Dproj,Dlin)
    b_ex = jnp.stack([lp["b_expand"] for lp in params["layers"]])       # (L,1,Dlin)

    # Zero-pad the decision head to 128 lanes (sliced off after the call).
    w_dec = jnp.zeros((Dlin, npad), jnp.float32).at[:, :nsyn].set(params["decision"]["w"])
    b_dec = jnp.zeros((1, npad), jnp.float32).at[:, :nsyn].set(params["decision"]["b"])

    in_specs = [
        pl.BlockSpec((1, C * BB * T, Din), lambda g: (g, 0, 0)),
        pl.BlockSpec((Din, Dlin), lambda g: (0, 0)),
        pl.BlockSpec((1, Dlin), lambda g: (0, 0)),
        pl.BlockSpec((n_layers, Dlin, Dproj), lambda g: (0, 0, 0)),
        pl.BlockSpec((n_layers, n_taps, Dproj), lambda g: (0, 0, 0)),
        pl.BlockSpec((n_layers, Dproj, Dlin), lambda g: (0, 0, 0)),
        pl.BlockSpec((n_layers, 1, Dlin), lambda g: (0, 0, 0)),
        pl.BlockSpec((Dlin, npad), lambda g: (0, 0)),
        pl.BlockSpec((1, npad), lambda g: (0, 0)),
    ]

    kernel = functools.partial(
        _fsmn_sele_net_kernel, n_layers=n_layers, C=C, T=T, BB=BB,
        lorder=lorder, rorder=rorder, sele_layer=sele_layer,
        Dproj=Dproj, use_bf16=use_bf16)

    out = pl.pallas_call(
        kernel,
        out_shape=jax.ShapeDtypeStruct((G, BB * T, npad), jnp.float32),
        grid=(G,),
        in_specs=in_specs,
        out_specs=pl.BlockSpec((1, BB * T, npad), lambda g: (g, 0, 0)),
        compiler_params=pltpu.CompilerParams(dimension_semantics=("parallel",)),
    )(x_cm, params["featmap"]["w"], params["featmap"]["b"],
      w_sh, w_mem, w_ex, b_ex, w_dec, b_dec)

    out = out.reshape(B, T, npad)
    # NOTE: if the consumer can take the 128-lane-padded output, drop this slice.
    return out[:, :, :nsyn]


# ---------------------------------------------------------------------------
# Deterministic synthetic parameters + pure-JAX reference
# ---------------------------------------------------------------------------
def init_params(key, input_dim, linear_dim, proj_dim, lorder, rorder, num_syn, fsmn_layers):
    def nrm(k, shape, scale=0.1):
        return scale * jax.random.normal(k, shape, jnp.float32)

    keys = jax.random.split(key, 4 + fsmn_layers)
    params = {
        "featmap": {"w": nrm(keys[0], (input_dim, linear_dim)),
                    "b": nrm(keys[1], (1, linear_dim))},
        "decision": {"w": nrm(keys[2], (linear_dim, num_syn)),
                     "b": nrm(keys[3], (1, num_syn))},
        "layers": [],
    }
    for i in range(fsmn_layers):
        k = jax.random.split(keys[4 + i], 4)
        params["layers"].append({
            "w_shrink": nrm(k[0], (linear_dim, proj_dim)),
            "w_mem": nrm(k[1], (lorder + rorder, proj_dim)),
            "w_expand": nrm(k[2], (proj_dim, linear_dim)),
            "b_expand": nrm(k[3], (1, linear_dim)),
        })
    return params


def reference_forward(x_btcf, params, *, lorder, rorder, sele_layer):
    """Plain-JAX re-statement of the PyTorch forward (PyTorch BTCF layout)."""
    x = jax.nn.relu(jnp.einsum("btcf,fo->btco", x_btcf, params["featmap"]["w"])
                    + params["featmap"]["b"][0])
    for i, lp in enumerate(params["layers"]):
        p = jnp.einsum("btcf,fp->btcp", x, lp["w_shrink"])
        T = p.shape[1]
        ppad = jnp.pad(p, ((0, 0), (lorder - 1, rorder), (0, 0), (0, 0)))
        m = p
        for s in range(lorder + rorder):
            m = m + ppad[:, s:s + T] * lp["w_mem"][s][None, None, None, :]
        y = jax.nn.relu(jnp.einsum("btcp,pl->btcl", m, lp["w_expand"]) + lp["b_expand"][0])
        if i == sele_layer:
            y = jnp.max(y, axis=2, keepdims=True)   # MaxPool2d((C,1)) over channel
        x = y
    y = x[:, :, 0, :]
    return jnp.einsum("btl,ln->btn", y, params["decision"]["w"]) + params["decision"]["b"][0]


# ---------------------------------------------------------------------------
if __name__ == "__main__":
    # Small shapes consistent with the module: (batch, time, channel, feature)
    B, T, C = 2, 16, 3
    input_dim, linear_dim, proj_dim = 24, 32, 16
    lorder, rorder = 4, 1
    num_syn, fsmn_layers, sele_layer = 5, 3, 0

    key = jax.random.PRNGKey(0)
    kx, kp = jax.random.split(key)
    x = jax.random.normal(kx, (B, T, C, input_dim), jnp.float32)
    params = init_params(kp, input_dim, linear_dim, proj_dim,
                         lorder, rorder, num_syn, fsmn_layers)

    fwd = jax.jit(functools.partial(fsmn_sele_net_v2_forward,
                                    lorder=lorder, rorder=rorder,
                                    sele_layer=sele_layer))
    out = jax.block_until_ready(fwd(x, params))

    ref = reference_forward(x, params, lorder=lorder, rorder=rorder,
                            sele_layer=sele_layer)
    np.testing.assert_allclose(np.asarray(out), np.asarray(ref), rtol=2e-3, atol=1e-4)
    assert out.shape == (B, T, num_syn)
    print("KERNEL_OK")
</pallas_src>

<mosaic_0001>
module attributes {stable_mosaic.version = 11 : i64} {
  func.func @_fsmn_sele_net_kernel(%arg0: i32, %arg1: memref<1x96x24xf32, #tpu.memory_space<vmem>>, %arg2: memref<24x32xf32, #tpu.memory_space<vmem>>, %arg3: memref<1x32xf32, #tpu.memory_space<vmem>>, %arg4: memref<3x32x16xf32, #tpu.memory_space<vmem>>, %arg5: memref<3x5x16xf32, #tpu.memory_space<vmem>>, %arg6: memref<3x16x32xf32, #tpu.memory_space<vmem>>, %arg7: memref<3x1x32xf32, #tpu.memory_space<vmem>>, %arg8: memref<32x128xf32, #tpu.memory_space<vmem>>, %arg9: memref<1x128xf32, #tpu.memory_space<vmem>>, %arg10: memref<1x32x128xf32, #tpu.memory_space<vmem>>) attributes {dimension_semantics = [#tpu.dimension_semantics<parallel>], iteration_bounds = array<i64: 1>, scalar_prefetch = 0 : i64, scratch_operands = 0 : i64, tpu.core_type = #tpu.core_type<tc>, window_params = [{transform_indices = @transform_0, window_bounds = array<i64: 1, 96, 24>}, {pipeline_mode = #tpu.pipeline_mode<synchronous>, transform_indices = @transform_1, window_bounds = array<i64: 24, 32>}, {pipeline_mode = #tpu.pipeline_mode<synchronous>, transform_indices = @transform_2, window_bounds = array<i64: 1, 32>}, {pipeline_mode = #tpu.pipeline_mode<synchronous>, transform_indices = @transform_3, window_bounds = array<i64: 3, 32, 16>}, {pipeline_mode = #tpu.pipeline_mode<synchronous>, transform_indices = @transform_4, window_bounds = array<i64: 3, 5, 16>}, {pipeline_mode = #tpu.pipeline_mode<synchronous>, transform_indices = @transform_5, window_bounds = array<i64: 3, 16, 32>}, {pipeline_mode = #tpu.pipeline_mode<synchronous>, transform_indices = @transform_6, window_bounds = array<i64: 3, 1, 32>}, {pipeline_mode = #tpu.pipeline_mode<synchronous>, transform_indices = @transform_7, window_bounds = array<i64: 32, 128>}, {pipeline_mode = #tpu.pipeline_mode<synchronous>, transform_indices = @transform_8, window_bounds = array<i64: 1, 128>}, {transform_indices = @transform_9, window_bounds = array<i64: 1, 32, 128>}]} {
    %c0 = arith.constant 0 : index
    %c0_0 = arith.constant 0 : index
    %c0_1 = arith.constant 0 : index
    %0 = vector.load %arg1[%c0, %c0_0, %c0_1] : memref<1x96x24xf32, #tpu.memory_space<vmem>>, vector<1x96x24xf32>
    %1 = vector.shape_cast %0 : vector<1x96x24xf32> to vector<96x24xf32>
    %c0_2 = arith.constant 0 : index
    %c0_3 = arith.constant 0 : index
    %2 = vector.load %arg2[%c0_2, %c0_3] : memref<24x32xf32, #tpu.memory_space<vmem>>, vector<24x32xf32>
    %cst = arith.constant dense<0.000000e+00> : vector<96x32xf32>
    %3 = tpu.matmul %1, %2, %cst {dimension_numbers = #tpu.dot_dimension_numbers<[1], [0], [0], [1], [0, 0, 1, 1], [], []>} : vector<96x24xf32>, vector<24x32xf32>, vector<96x32xf32> -> vector<96x32xf32>
    %c0_4 = arith.constant 0 : index
    %c0_5 = arith.constant 0 : index
    %4 = vector.load %arg3[%c0_4, %c0_5] : memref<1x32xf32, #tpu.memory_space<vmem>>, vector<1x32xf32>
    %5 = vector.broadcast %4 : vector<1x32xf32> to vector<96x32xf32>
    %6 = arith.addf %3, %5 : vector<96x32xf32>
    %cst_6 = arith.constant 0.000000e+00 : f32
    %7 = vector.broadcast %cst_6 : f32 to vector<96x32xf32>
    %8 = arith.maximumf %6, %7 : vector<96x32xf32>
    %9 = tpu.iota {dimensions = array<i32: 0>} : vector<96x16xi32>
    %c16_i32 = arith.constant 16 : i32
    %c0_i32 = arith.constant 0 : i32
    %10 = arith.cmpi eq, %c16_i32, %c0_i32 : i32
    %c1_i32 = arith.constant 1 : i32
    %11 = arith.select %10, %c1_i32, %c16_i32 : i32
    %12 = vector.broadcast %11 : i32 to vector<96x16xi32>
    %13 = arith.remsi %9, %12 : vector<96x16xi32>
    %c0_i32_7 = arith.constant 0 : i32
    %14 = vector.broadcast %c0_i32_7 : i32 to vector<96x16xi32>
    %15 = arith.cmpi ne, %13, %14 : vector<96x16xi32>
    %c0_i32_8 = arith.constant 0 : i32
    %16 = vector.broadcast %c0_i32_8 : i32 to vector<96x16xi32>
    %17 = arith.cmpi slt, %13, %16 : vector<96x16xi32>
    %c0_i32_9 = arith.constant 0 : i32
    %18 = arith.cmpi slt, %11, %c0_i32_9 : i32
    %19 = vector.broadcast %18 : i1 to vector<96x16xi1>
    %20 = vector.broadcast %19 : vector<96x16xi1> to vector<96x16xi1>
    %21 = arith.xori %17, %20 : vector<96x16xi1>
    %22 = arith.andi %21, %15 : vector<96x16xi1>
    %23 = vector.broadcast %11 : i32 to vector<96x16xi32>
    %24 = arith.addi %13, %23 : vector<96x16xi32>
    %25 = arith.select %22, %24, %13 : vector<96x16xi1>, vector<96x16xi32>
    %c3_i32 = arith.constant 3 : i32
    %26 = vector.broadcast %c3_i32 : i32 to vector<96x16xi32>
    %27 = arith.cmpi sge, %25, %26 : vector<96x16xi32>
    %c2_i32 = arith.constant 2 : i32
    %28 = vector.broadcast %c2_i32 : i32 to vector<96x16xi32>
    %29 = arith.cmpi sge, %25, %28 : vector<96x16xi32>
    %c1_i32_10 = arith.constant 1 : i32
    %30 = vector.broadcast %c1_i32_10 : i32 to vector<96x16xi32>
    %31 = arith.cmpi sge, %25, %30 : vector<96x16xi32>
    %c15_i32 = arith.constant 15 : i32
    %32 = vector.broadcast %c15_i32 : i32 to vector<96x16xi32>
    %33 = arith.cmpi slt, %25, %32 : vector<96x16xi32>
    %34 = tpu.iota {dimensions = array<i32: 0>} : vector<32x16xi32>
    %c16_i32_11 = arith.constant 16 : i32
    %c0_i32_12 = arith.constant 0 : i32
    %35 = arith.cmpi eq, %c16_i32_11, %c0_i32_12 : i32
    %c1_i32_13 = arith.constant 1 : i32
    %36 = arith.select %35, %c1_i32_13, %c16_i32_11 : i32
    %37 = vector.broadcast %36 : i32 to vector<32x16xi32>
    %38 = arith.remsi %34, %37 : vector<32x16xi32>
    %c0_i32_14 = arith.constant 0 : i32
    %39 = vector.broadcast %c0_i32_14 : i32 to vector<32x16xi32>
    %40 = arith.cmpi ne, %38, %39 : vector<32x16xi32>
    %c0_i32_15 = arith.constant 0 : i32
    %41 = vector.broadcast %c0_i32_15 : i32 to vector<32x16xi32>
    %42 = arith.cmpi slt, %38, %41 : vector<32x16xi32>
    %c0_i32_16 = arith.constant 0 : i32
    %43 = arith.cmpi slt, %36, %c0_i32_16 : i32
    %44 = vector.broadcast %43 : i1 to vector<32x16xi1>
    %45 = vector.broadcast %44 : vector<32x16xi1> to vector<32x16xi1>
    %46 = arith.xori %42, %45 : vector<32x16xi1>
    %47 = arith.andi %46, %40 : vector<32x16xi1>
    %48 = vector.broadcast %36 : i32 to vector<32x16xi32>
    %49 = arith.addi %38, %48 : vector<32x16xi32>
    %50 = arith.select %47, %49, %38 : vector<32x16xi1>, vector<32x16xi32>
    %c3_i32_17 = arith.constant 3 : i32
    %51 = vector.broadcast %c3_i32_17 : i32 to vector<32x16xi32>
    %52 = arith.cmpi sge, %50, %51 : vector<32x16xi32>
    %c2_i32_18 = arith.constant 2 : i32
    %53 = vector.broadcast %c2_i32_18 : i32 to vector<32x16xi32>
    %54 = arith.cmpi sge, %50, %53 : vector<32x16xi32>
    %c1_i32_19 = arith.constant 1 : i32
    %55 = vector.broadcast %c1_i32_19 : i32 to vector<32x16xi32>
    %56 = arith.cmpi sge, %50, %55 : vector<32x16xi32>
    %c15_i32_20 = arith.constant 15 : i32
    %57 = vector.broadcast %c15_i32_20 : i32 to vector<32x16xi32>
    %58 = arith.cmpi slt, %50, %57 : vector<32x16xi32>
    %c0_21 = arith.constant 0 : index
    %c0_22 = arith.constant 0 : index
    %c0_23 = arith.constant 0 : index
    %59 = vector.load %arg4[%c0_21, %c0_22, %c0_23] : memref<3x32x16xf32, #tpu.memory_space<vmem>>, vector<1x32x16xf32>
    %60 = vector.shape_cast %59 : vector<1x32x16xf32> to vector<32x16xf32>
    %c0_24 = arith.constant 0 : index
    %c0_25 = arith.constant 0 : index
    %c0_26 = arith.constant 0 : index
    %61 = vector.load %arg5[%c0_24, %c0_25, %c0_26] : memref<3x5x16xf32, #tpu.memory_space<vmem>>, vector<1x5x16xf32>
    %62 = vector.shape_cast %61 : vector<1x5x16xf32> to vector<5x16xf32>
    %c0_27 = arith.constant 0 : index
    %c0_28 = arith.constant 0 : index
    %c0_29 = arith.constant 0 : index
    %63 = vector.load %arg6[%c0_27, %c0_28, %c0_29] : memref<3x16x32xf32, #tpu.memory_space<vmem>>, vector<1x16x32xf32>
    %64 = vector.shape_cast %63 : vector<1x16x32xf32> to vector<16x32xf32>
    %c0_30 = arith.constant 0 : index
    %c0_31 = arith.constant 0 : index
    %c0_32 = arith.constant 0 : index
    %65 = vector.load %arg7[%c0_30, %c0_31, %c0_32] : memref<3x1x32xf32, #tpu.memory_space<vmem>>, vector<1x1x32xf32>
    %66 = vector.shape_cast %65 : vector<1x1x32xf32> to vector<1x32xf32>
    %cst_33 = arith.constant dense<0.000000e+00> : vector<96x16xf32>
    %67 = tpu.matmul %8, %60, %cst_33 {dimension_numbers = #tpu.dot_dimension_numbers<[1], [0], [0], [1], [0, 0, 1, 1], [], []>} : vector<96x32xf32>, vector<32x16xf32>, vector<96x16xf32> -> vector<96x16xf32>
    %68 = vector.extract_strided_slice %62 {offsets = [3, 0], sizes = [1, 16], strides = [1, 1]} : vector<5x16xf32> to vector<1x16xf32>
    %69 = vector.broadcast %68 : vector<1x16xf32> to vector<96x16xf32>
    %70 = arith.mulf %67, %69 : vector<96x16xf32>
    %c3_i32_34 = arith.constant 3 : i32
    %71 = tpu.dynamic_rotate %67 by %c3_i32_34 dim 0 : vector<96x16xf32>, i32 -> vector<96x16xf32>
    %cst_35 = arith.constant 0.000000e+00 : f32
    %72 = vector.broadcast %cst_35 : f32 to vector<96x16xf32>
    %73 = arith.select %27, %71, %72 : vector<96x16xi1>, vector<96x16xf32>
    %74 = vector.extract_strided_slice %62 {offsets = [0, 0], sizes = [1, 16], strides = [1, 1]} : vector<5x16xf32> to vector<1x16xf32>
    %75 = vector.broadcast %74 : vector<1x16xf32> to vector<96x16xf32>
    %76 = arith.mulf %73, %75 : vector<96x16xf32>
    %77 = arith.addf %70, %76 : vector<96x16xf32>
    %c2_i32_36 = arith.constant 2 : i32
    %78 = tpu.dynamic_rotate %67 by %c2_i32_36 dim 0 : vector<96x16xf32>, i32 -> vector<96x16xf32>
    %cst_37 = arith.constant 0.000000e+00 : f32
    %79 = vector.broadcast %cst_37 : f32 to vector<96x16xf32>
    %80 = arith.select %29, %78, %79 : vector<96x16xi1>, vector<96x16xf32>
    %81 = vector.extract_strided_slice %62 {offsets = [1, 0], sizes = [1, 16], strides = [1, 1]} : vector<5x16xf32> to vector<1x16xf32>
    %82 = vector.broadcast %81 : vector<1x16xf32> to vector<96x16xf32>
    %83 = arith.mulf %80, %82 : vector<96x16xf32>
    %84 = arith.addf %77, %83 : vector<96x16xf32>
    %c1_i32_38 = arith.constant 1 : i32
    %85 = tpu.dynamic_rotate %67 by %c1_i32_38 dim 0 : vector<96x16xf32>, i32 -> vector<96x16xf32>
    %cst_39 = arith.constant 0.000000e+00 : f32
    %86 = vector.broadcast %cst_39 : f32 to vector<96x16xf32>
    %87 = arith.select %31, %85, %86 : vector<96x16xi1>, vector<96x16xf32>
    %88 = vector.extract_strided_slice %62 {offsets = [2, 0], sizes = [1, 16], strides = [1, 1]} : vector<5x16xf32> to vector<1x16xf32>
    %89 = vector.broadcast %88 : vector<1x16xf32> to vector<96x16xf32>
    %90 = arith.mulf %87, %89 : vector<96x16xf32>
    %91 = arith.addf %84, %90 : vector<96x16xf32>
    %c95_i32 = arith.constant 95 : i32
    %92 = tpu.dynamic_rotate %67 by %c95_i32 dim 0 : vector<96x16xf32>, i32 -> vector<96x16xf32>
    %cst_40 = arith.constant 0.000000e+00 : f32
    %93 = vector.broadcast %cst_40 : f32 to vector<96x16xf32>
    %94 = arith.select %33, %92, %93 : vector<96x16xi1>, vector<96x16xf32>
    %95 = vector.extract_strided_slice %62 {offsets = [4, 0], sizes = [1, 16], strides = [1, 1]} : vector<5x16xf32> to vector<1x16xf32>
    %96 = vector.broadcast %95 : vector<1x16xf32> to vector<96x16xf32>
    %97 = arith.mulf %94, %96 : vector<96x16xf32>
    %98 = arith.addf %91, %97 : vector<96x16xf32>
    %cst_41 = arith.constant dense<0.000000e+00> : vector<96x32xf32>
    %99 = tpu.matmul %98, %64, %cst_41 {dimension_numbers = #tpu.dot_dimension_numbers<[1], [0], [0], [1], [0, 0, 1, 1], [], []>} : vector<96x16xf32>, vector<16x32xf32>, vector<96x32xf32> -> vector<96x32xf32>
    %100 = vector.broadcast %66 : vector<1x32xf32> to vector<96x32xf32>
    %101 = arith.addf %99, %100 : vector<96x32xf32>
    %cst_42 = arith.constant 0.000000e+00 : f32
    %102 = vector.broadcast %cst_42 : f32 to vector<96x32xf32>
    %103 = arith.maximumf %101, %102 : vector<96x32xf32>
    %104 = vector.extract_strided_slice %103 {offsets = [0, 0], sizes = [32, 32], strides = [1, 1]} : vector<96x32xf32> to vector<32x32xf32>
    %105 = vector.extract_strided_slice %103 {offsets = [32, 0], sizes = [32, 32], strides = [1, 1]} : vector<96x32xf32> to vector<32x32xf32>
    %106 = arith.maximumf %104, %105 : vector<32x32xf32>
    %107 = vector.extract_strided_slice %103 {offsets = [64, 0], sizes = [32, 32], strides = [1, 1]} : vector<96x32xf32> to vector<32x32xf32>
    %108 = arith.maximumf %106, %107 : vector<32x32xf32>
    %c1 = arith.constant 1 : index
    %c0_43 = arith.constant 0 : index
    %c0_44 = arith.constant 0 : index
    %109 = vector.load %arg4[%c1, %c0_43, %c0_44] : memref<3x32x16xf32, #tpu.memory_space<vmem>>, vector<1x32x16xf32>
    %110 = vector.shape_cast %109 : vector<1x32x16xf32> to vector<32x16xf32>
    %c1_45 = arith.constant 1 : index
    %c0_46 = arith.constant 0 : index
    %c0_47 = arith.constant 0 : index
    %111 = vector.load %arg5[%c1_45, %c0_46, %c0_47] : memref<3x5x16xf32, #tpu.memory_space<vmem>>, vector<1x5x16xf32>
    %112 = vector.shape_cast %111 : vector<1x5x16xf32> to vector<5x16xf32>
    %c1_48 = arith.constant 1 : index
    %c0_49 = arith.constant 0 : index
    %c0_50 = arith.constant 0 : index
    %113 = vector.load %arg6[%c1_48, %c0_49, %c0_50] : memref<3x16x32xf32, #tpu.memory_space<vmem>>, vector<1x16x32xf32>
    %114 = vector.shape_cast %113 : vector<1x16x32xf32> to vector<16x32xf32>
    %c1_51 = arith.constant 1 : index
    %c0_52 = arith.constant 0 : index
    %c0_53 = arith.constant 0 : index
    %115 = vector.load %arg7[%c1_51, %c0_52, %c0_53] : memref<3x1x32xf32, #tpu.memory_space<vmem>>, vector<1x1x32xf32>
    %116 = vector.shape_cast %115 : vector<1x1x32xf32> to vector<1x32xf32>
    %cst_54 = arith.constant dense<0.000000e+00> : vector<32x16xf32>
    %117 = tpu.matmul %108, %110, %cst_54 {dimension_numbers = #tpu.dot_dimension_numbers<[1], [0], [0], [1], [0, 0, 1, 1], [], []>} : vector<32x32xf32>, vector<32x16xf32>, vector<32x16xf32> -> vector<32x16xf32>
    %118 = vector.extract_strided_slice %112 {offsets = [3, 0], sizes = [1, 16], strides = [1, 1]} : vector<5x16xf32> to vector<1x16xf32>
    %119 = vector.broadcast %118 : vector<1x16xf32> to vector<32x16xf32>
    %120 = arith.mulf %117, %119 : vector<32x16xf32>
    %c3_i32_55 = arith.constant 3 : i32
    %121 = tpu.dynamic_rotate %117 by %c3_i32_55 dim 0 : vector<32x16xf32>, i32 -> vector<32x16xf32>
    %cst_56 = arith.constant 0.000000e+00 : f32
    %122 = vector.broadcast %cst_56 : f32 to vector<32x16xf32>
    %123 = arith.select %52, %121, %122 : vector<32x16xi1>, vector<32x16xf32>
    %124 = vector.extract_strided_slice %112 {offsets = [0, 0], sizes = [1, 16], strides = [1, 1]} : vector<5x16xf32> to vector<1x16xf32>
    %125 = vector.broadcast %124 : vector<1x16xf32> to vector<32x16xf32>
    %126 = arith.mulf %123, %125 : vector<32x16xf32>
    %127 = arith.addf %120, %126 : vector<32x16xf32>
    %c2_i32_57 = arith.constant 2 : i32
    %128 = tpu.dynamic_rotate %117 by %c2_i32_57 dim 0 : vector<32x16xf32>, i32 -> vector<32x16xf32>
    %cst_58 = arith.constant 0.000000e+00 : f32
    %129 = vector.broadcast %cst_58 : f32 to vector<32x16xf32>
    %130 = arith.select %54, %128, %129 : vector<32x16xi1>, vector<32x16xf32>
    %131 = vector.extract_strided_slice %112 {offsets = [1, 0], sizes = [1, 16], strides = [1, 1]} : vector<5x16xf32> to vector<1x16xf32>
    %132 = vector.broadcast %131 : vector<1x16xf32> to vector<32x16xf32>
    %133 = arith.mulf %130, %132 : vector<32x16xf32>
    %134 = arith.addf %127, %133 : vector<32x16xf32>
    %c1_i32_59 = arith.constant 1 : i32
    %135 = tpu.dynamic_rotate %117 by %c1_i32_59 dim 0 : vector<32x16xf32>, i32 -> vector<32x16xf32>
    %cst_60 = arith.constant 0.000000e+00 : f32
    %136 = vector.broadcast %cst_60 : f32 to vector<32x16xf32>
    %137 = arith.select %56, %135, %136 : vector<32x16xi1>, vector<32x16xf32>
    %138 = vector.extract_strided_slice %112 {offsets = [2, 0], sizes = [1, 16], strides = [1, 1]} : vector<5x16xf32> to vector<1x16xf32>
    %139 = vector.broadcast %138 : vector<1x16xf32> to vector<32x16xf32>
    %140 = arith.mulf %137, %139 : vector<32x16xf32>
    %141 = arith.addf %134, %140 : vector<32x16xf32>
    %c31_i32 = arith.constant 31 : i32
    %142 = tpu.dynamic_rotate %117 by %c31_i32 dim 0 : vector<32x16xf32>, i32 -> vector<32x16xf32>
    %cst_61 = arith.constant 0.000000e+00 : f32
    %143 = vector.broadcast %cst_61 : f32 to vector<32x16xf32>
    %144 = arith.select %58, %142, %143 : vector<32x16xi1>, vector<32x16xf32>
    %145 = vector.extract_strided_slice %112 {offsets = [4, 0], sizes = [1, 16], strides = [1, 1]} : vector<5x16xf32> to vector<1x16xf32>
    %146 = vector.broadcast %145 : vector<1x16xf32> to vector<32x16xf32>
    %147 = arith.mulf %144, %146 : vector<32x16xf32>
    %148 = arith.addf %141, %147 : vector<32x16xf32>
    %cst_62 = arith.constant dense<0.000000e+00> : vector<32x32xf32>
    %149 = tpu.matmul %148, %114, %cst_62 {dimension_numbers = #tpu.dot_dimension_numbers<[1], [0], [0], [1], [0, 0, 1, 1], [], []>} : vector<32x16xf32>, vector<16x32xf32>, vector<32x32xf32> -> vector<32x32xf32>
    %150 = vector.broadcast %116 : vector<1x32xf32> to vector<32x32xf32>
    %151 = arith.addf %149, %150 : vector<32x32xf32>
    %cst_63 = arith.constant 0.000000e+00 : f32
    %152 = vector.broadcast %cst_63 : f32 to vector<32x32xf32>
    %153 = arith.maximumf %151, %152 : vector<32x32xf32>
    %c2 = arith.constant 2 : index
    %c0_64 = arith.constant 0 : index
    %c0_65 = arith.constant 0 : index
    %154 = vector.load %arg4[%c2, %c0_64, %c0_65] : memref<3x32x16xf32, #tpu.memory_space<vmem>>, vector<1x32x16xf32>
    %155 = vector.shape_cast %154 : vector<1x32x16xf32> to vector<32x16xf32>
    %c2_66 = arith.constant 2 : index
    %c0_67 = arith.constant 0 : index
    %c0_68 = arith.constant 0 : index
    %156 = vector.load %arg5[%c2_66, %c0_67, %c0_68] : memref<3x5x16xf32, #tpu.memory_space<vmem>>, vector<1x5x16xf32>
    %157 = vector.shape_cast %156 : vector<1x5x16xf32> to vector<5x16xf32>
    %c2_69 = arith.constant 2 : index
    %c0_70 = arith.constant 0 : index
    %c0_71 = arith.constant 0 : index
    %158 = vector.load %arg6[%c2_69, %c0_70, %c0_71] : memref<3x16x32xf32, #tpu.memory_space<vmem>>, vector<1x16x32xf32>
    %159 = vector.shape_cast %158 : vector<1x16x32xf32> to vector<16x32xf32>
    %c2_72 = arith.constant 2 : index
    %c0_73 = arith.constant 0 : index
    %c0_74 = arith.constant 0 : index
    %160 = vector.load %arg7[%c2_72, %c0_73, %c0_74] : memref<3x1x32xf32, #tpu.memory_space<vmem>>, vector<1x1x32xf32>
    %161 = vector.shape_cast %160 : vector<1x1x32xf32> to vector<1x32xf32>
    %cst_75 = arith.constant dense<0.000000e+00> : vector<32x16xf32>
    %162 = tpu.matmul %153, %155, %cst_75 {dimension_numbers = #tpu.dot_dimension_numbers<[1], [0], [0], [1], [0, 0, 1, 1], [], []>} : vector<32x32xf32>, vector<32x16xf32>, vector<32x16xf32> -> vector<32x16xf32>
    %163 = vector.extract_strided_slice %157 {offsets = [3, 0], sizes = [1, 16], strides = [1, 1]} : vector<5x16xf32> to vector<1x16xf32>
    %164 = vector.broadcast %163 : vector<1x16xf32> to vector<32x16xf32>
    %165 = arith.mulf %162, %164 : vector<32x16xf32>
    %c3_i32_76 = arith.constant 3 : i32
    %166 = tpu.dynamic_rotate %162 by %c3_i32_76 dim 0 : vector<32x16xf32>, i32 -> vector<32x16xf32>
    %cst_77 = arith.constant 0.000000e+00 : f32
    %167 = vector.broadcast %cst_77 : f32 to vector<32x16xf32>
    %168 = arith.select %52, %166, %167 : vector<32x16xi1>, vector<32x16xf32>
    %169 = vector.extract_strided_slice %157 {offsets = [0, 0], sizes = [1, 16], strides = [1, 1]} : vector<5x16xf32> to vector<1x16xf32>
    %170 = vector.broadcast %169 : vector<1x16xf32> to vector<32x16xf32>
    %171 = arith.mulf %168, %170 : vector<32x16xf32>
    %172 = arith.addf %165, %171 : vector<32x16xf32>
    %c2_i32_78 = arith.constant 2 : i32
    %173 = tpu.dynamic_rotate %162 by %c2_i32_78 dim 0 : vector<32x16xf32>, i32 -> vector<32x16xf32>
    %cst_79 = arith.constant 0.000000e+00 : f32
    %174 = vector.broadcast %cst_79 : f32 to vector<32x16xf32>
    %175 = arith.select %54, %173, %174 : vector<32x16xi1>, vector<32x16xf32>
    %176 = vector.extract_strided_slice %157 {offsets = [1, 0], sizes = [1, 16], strides = [1, 1]} : vector<5x16xf32> to vector<1x16xf32>
    %177 = vector.broadcast %176 : vector<1x16xf32> to vector<32x16xf32>
    %178 = arith.mulf %175, %177 : vector<32x16xf32>
    %179 = arith.addf %172, %178 : vector<32x16xf32>
    %c1_i32_80 = arith.constant 1 : i32
    %180 = tpu.dynamic_rotate %162 by %c1_i32_80 dim 0 : vector<32x16xf32>, i32 -> vector<32x16xf32>
    %cst_81 = arith.constant 0.000000e+00 : f32
    %181 = vector.broadcast %cst_81 : f32 to vector<32x16xf32>
    %182 = arith.select %56, %180, %181 : vector<32x16xi1>, vector<32x16xf32>
    %183 = vector.extract_strided_slice %157 {offsets = [2, 0], sizes = [1, 16], strides = [1, 1]} : vector<5x16xf32> to vector<1x16xf32>
    %184 = vector.broadcast %183 : vector<1x16xf32> to vector<32x16xf32>
    %185 = arith.mulf %182, %184 : vector<32x16xf32>
    %186 = arith.addf %179, %185 : vector<32x16xf32>
    %c31_i32_82 = arith.constant 31 : i32
    %187 = tpu.dynamic_rotate %162 by %c31_i32_82 dim 0 : vector<32x16xf32>, i32 -> vector<32x16xf32>
    %cst_83 = arith.constant 0.000000e+00 : f32
    %188 = vector.broadcast %cst_83 : f32 to vector<32x16xf32>
    %189 = arith.select %58, %187, %188 : vector<32x16xi1>, vector<32x16xf32>
    %190 = vector.extract_strided_slice %157 {offsets = [4, 0], sizes = [1, 16], strides = [1, 1]} : vector<5x16xf32> to vector<1x16xf32>
    %191 = vector.broadcast %190 : vector<1x16xf32> to vector<32x16xf32>
    %192 = arith.mulf %189, %191 : vector<32x16xf32>
    %193 = arith.addf %186, %192 : vector<32x16xf32>
    %cst_84 = arith.constant dense<0.000000e+00> : vector<32x32xf32>
    %194 = tpu.matmul %193, %159, %cst_84 {dimension_numbers = #tpu.dot_dimension_numbers<[1], [0], [0], [1], [0, 0, 1, 1], [], []>} : vector<32x16xf32>, vector<16x32xf32>, vector<32x32xf32> -> vector<32x32xf32>
    %195 = vector.broadcast %161 : vector<1x32xf32> to vector<32x32xf32>
    %196 = arith.addf %194, %195 : vector<32x32xf32>
    %cst_85 = arith.constant 0.000000e+00 : f32
    %197 = vector.broadcast %cst_85 : f32 to vector<32x32xf32>
    %198 = arith.maximumf %196, %197 : vector<32x32xf32>
    %c0_86 = arith.constant 0 : index
    %c0_87 = arith.constant 0 : index
    %199 = vector.load %arg8[%c0_86, %c0_87] : memref<32x128xf32, #tpu.memory_space<vmem>>, vector<32x128xf32>
    %cst_88 = arith.constant dense<0.000000e+00> : vector<32x128xf32>
    %200 = tpu.matmul %198, %199, %cst_88 {dimension_numbers = #tpu.dot_dimension_numbers<[1], [0], [0], [1], [0, 0, 1, 1], [], []>} : vector<32x32xf32>, vector<32x128xf32>, vector<32x128xf32> -> vector<32x128xf32>
    %c0_89 = arith.constant 0 : index
    %c0_90 = arith.constant 0 : index
    %201 = vector.load %arg9[%c0_89, %c0_90] : memref<1x128xf32, #tpu.memory_space<vmem>>, vector<1x128xf32>
    %202 = vector.broadcast %201 : vector<1x128xf32> to vector<32x128xf32>
    %203 = arith.addf %200, %202 : vector<32x128xf32>
    %c0_91 = arith.constant 0 : index
    %c0_92 = arith.constant 0 : index
    %c0_93 = arith.constant 0 : index
    %204 = vector.load %arg10[%c0_91, %c0_92, %c0_93] : memref<1x32x128xf32, #tpu.memory_space<vmem>>, vector<1x32x128xf32>
    %205 = vector.shape_cast %204 : vector<1x32x128xf32> to vector<32x128xf32>
    %206 = vector.shape_cast %203 : vector<32x128xf32> to vector<1x32x128xf32>
    tpu.vector_store %arg10[%c0_91, %c0_92, %c0_93], %206 {strides = array<i32>} : memref<1x32x128xf32, #tpu.memory_space<vmem>>, vector<1x32x128xf32>,
    return
  }
  func.func @transform_0(%arg0: i32) -> (i32, i32, i32) {
    %c0_i32 = arith.constant 0 : i32
    %c0_i32_0 = arith.constant 0 : i32
    %c0_i32_1 = arith.constant 0 : i32
    return %arg0, %c0_i32, %c0_i32_0 : i32, i32, i32
  }
  func.func @transform_1(%arg0: i32) -> (i32, i32) {
    %c0_i32 = arith.constant 0 : i32
    %c0_i32_0 = arith.constant 0 : i32
    %c0_i32_1 = arith.constant 0 : i32
    return %c0_i32, %c0_i32_0 : i32, i32
  }
  func.func @transform_2(%arg0: i32) -> (i32, i32) {
    %c0_i32 = arith.constant 0 : i32
    %c0_i32_0 = arith.constant 0 : i32
    %c0_i32_1 = arith.constant 0 : i32
    return %c0_i32, %c0_i32_0 : i32, i32
  }
  func.func @transform_3(%arg0: i32) -> (i32, i32, i32) {
    %c0_i32 = arith.constant 0 : i32
    %c0_i32_0 = arith.constant 0 : i32
    %c0_i32_1 = arith.constant 0 : i32
    %c0_i32_2 = arith.constant 0 : i32
    return %c0_i32, %c0_i32_0, %c0_i32_1 : i32, i32, i32
  }
  func.func @transform_4(%arg0: i32) -> (i32, i32, i32) {
    %c0_i32 = arith.constant 0 : i32
    %c0_i32_0 = arith.constant 0 : i32
    %c0_i32_1 = arith.constant 0 : i32
    %c0_i32_2 = arith.constant 0 : i32
    return %c0_i32, %c0_i32_0, %c0_i32_1 : i32, i32, i32
  }
  func.func @transform_5(%arg0: i32) -> (i32, i32, i32) {
    %c0_i32 = arith.constant 0 : i32
    %c0_i32_0 = arith.constant 0 : i32
    %c0_i32_1 = arith.constant 0 : i32
    %c0_i32_2 = arith.constant 0 : i32
    return %c0_i32, %c0_i32_0, %c0_i32_1 : i32, i32, i32
  }
  func.func @transform_6(%arg0: i32) -> (i32, i32, i32) {
    %c0_i32 = arith.constant 0 : i32
    %c0_i32_0 = arith.constant 0 : i32
    %c0_i32_1 = arith.constant 0 : i32
    %c0_i32_2 = arith.constant 0 : i32
    return %c0_i32, %c0_i32_0, %c0_i32_1 : i32, i32, i32
  }
  func.func @transform_7(%arg0: i32) -> (i32, i32) {
    %c0_i32 = arith.constant 0 : i32
    %c0_i32_0 = arith.constant 0 : i32
    %c0_i32_1 = arith.constant 0 : i32
    return %c0_i32, %c0_i32_0 : i32, i32
  }
  func.func @transform_8(%arg0: i32) -> (i32, i32) {
    %c0_i32 = arith.constant 0 : i32
    %c0_i32_0 = arith.constant 0 : i32
    %c0_i32_1 = arith.constant 0 : i32
    return %c0_i32, %c0_i32_0 : i32, i32
  }
  func.func @transform_9(%arg0: i32) -> (i32, i32, i32) {
    %c0_i32 = arith.constant 0 : i32
    %c0_i32_0 = arith.constant 0 : i32
    %c0_i32_1 = arith.constant 0 : i32
    return %arg0, %c0_i32, %c0_i32_0 : i32, i32, i32
  }
}

</mosaic_0001>

<llo_original>
// kernel: fsmn_sele_net_v2_forward.1
$region0: #{fsmn_sele_net_v2_forward.1}
  #allocation0 [shape = 'u32[]', space=smem, size = 0x4, offset = 0x4, fixed_abs, tag = 'smem constant byte address 0x4 - core index']
  #allocation1 [shape = 'u32[144,128]{1,0:T(1,128)}', space=vmem, size = 0x12000, scoped, tag = 'internal scratch']
  %s0 = inlined_call_operand.vmem [shape: f32[1,96,24], index: 0, kind: input, shape index: {}]
  %s1 = inlined_call_operand.vmem [shape: f32[24,32], index: 1, kind: input, shape index: {}]
  %s2 = inlined_call_operand.vmem [shape: f32[1,32], index: 2, kind: input, shape index: {}]
  %s3 = inlined_call_operand.vmem [shape: f32[3,32,16], index: 3, kind: input, shape index: {}]
  %s4 = inlined_call_operand.vmem [shape: f32[3,5,16], index: 4, kind: input, shape index: {}]
  %s5 = inlined_call_operand.vmem [shape: f32[3,16,32], index: 5, kind: input, shape index: {}]
  %s6 = inlined_call_operand.vmem [shape: f32[3,1,32], index: 6, kind: input, shape index: {}]
  %s7 = inlined_call_operand.vmem [shape: f32[32,128], index: 7, kind: input, shape index: {}]
  %s8 = inlined_call_operand.vmem [shape: f32[1,128], index: 8, kind: input, shape index: {}]
  %s9 = inlined_call_operand.vmem [shape: f32[1,32,128], index: 9, kind: output, shape index: {}]
  %s10 = sld [smem:[#allocation0]]
  $region46: #{fsmn_sele_net_v2_forward.1} parent=0
    _
  %s12 = ssub.s32 1, %s10
  %s13 = scalar_select 0, %s12, %s10
  // Predicated region
  $region2: #{fsmn_sele_net_v2_forward.1} parent=0 // pred_check
    _
  $region3: #{fsmn_sele_net_v2_forward.1} parent=0 // pred_check_branch
    %15 = sbr.rel (0) target = $region5
  $region4: #{fsmn_sele_net_v2_forward.1} parent=0 // pred_region
    _
  $region5: #{fsmn_sele_net_v2_forward.1} parent=0 // pred_fallthru
    _
  // Predicated region
  $region6: #{fsmn_sele_net_v2_forward.1} parent=0 // pred_check
    _
  $region7: #{fsmn_sele_net_v2_forward.1} parent=0 // pred_check_branch
    %17 = sbr.rel (0) target = $region9
  $region8: #{fsmn_sele_net_v2_forward.1} parent=0 // pred_region
    _
  $region9: #{fsmn_sele_net_v2_forward.1} parent=0 // pred_fallthru
    _
  // Predicated region
  $region10: #{fsmn_sele_net_v2_forward.1} parent=0 // pred_check
    _
  $region11: #{fsmn_sele_net_v2_forward.1} parent=0 // pred_check_branch
    %19 = sbr.rel (0) target = $region13
  $region12: #{fsmn_sele_net_v2_forward.1} parent=0 // pred_region
    _
  $region13: #{fsmn_sele_net_v2_forward.1} parent=0 // pred_fallthru
    _
  // Predicated region
  $region14: #{fsmn_sele_net_v2_forward.1} parent=0 // pred_check
    _
  $region15: #{fsmn_sele_net_v2_forward.1} parent=0 // pred_check_branch
    %21 = sbr.rel (0) target = $region17
  $region16: #{fsmn_sele_net_v2_forward.1} parent=0 // pred_region
    _
  $region17: #{fsmn_sele_net_v2_forward.1} parent=0 // pred_fallthru
    _
  // Predicated region
  $region18: #{fsmn_sele_net_v2_forward.1} parent=0 // pred_check
    _
  $region19: #{fsmn_sele_net_v2_forward.1} parent=0 // pred_check_branch
    %23 = sbr.rel (0) target = $region21
  $region20: #{fsmn_sele_net_v2_forward.1} parent=0 // pred_region
    _
  $region21: #{fsmn_sele_net_v2_forward.1} parent=0 // pred_fallthru
    _
  // Predicated region
  $region22: #{fsmn_sele_net_v2_forward.1} parent=0 // pred_check
    _
  $region23: #{fsmn_sele_net_v2_forward.1} parent=0 // pred_check_branch
    %25 = sbr.rel (0) target = $region25
  $region24: #{fsmn_sele_net_v2_forward.1} parent=0 // pred_region
    _
  $region25: #{fsmn_sele_net_v2_forward.1} parent=0 // pred_fallthru
    _
  // Predicated region
  $region26: #{fsmn_sele_net_v2_forward.1} parent=0 // pred_check
    _
  $region27: #{fsmn_sele_net_v2_forward.1} parent=0 // pred_check_branch
    %27 = sbr.rel (0) target = $region29
  $region28: #{fsmn_sele_net_v2_forward.1} parent=0 // pred_region
    _
  $region29: #{fsmn_sele_net_v2_forward.1} parent=0 // pred_fallthru
    _
  // Predicated region
  $region30: #{fsmn_sele_net_v2_forward.1} parent=0 // pred_check
    _
  $region31: #{fsmn_sele_net_v2_forward.1} parent=0 // pred_check_branch
    %29 = sbr.rel (0) target = $region33
  $region32: #{fsmn_sele_net_v2_forward.1} parent=0 // pred_region
    _
  $region33: #{fsmn_sele_net_v2_forward.1} parent=0 // pred_fallthru
    _
  // Predicated region
  $region34: #{fsmn_sele_net_v2_forward.1} parent=0 // pred_check
    _
  $region35: #{fsmn_sele_net_v2_forward.1} parent=0 // pred_check_branch
    %31 = sbr.rel (0) target = $region37
  $region36: #{fsmn_sele_net_v2_forward.1} parent=0 // pred_region
    _
  $region37: #{fsmn_sele_net_v2_forward.1} parent=0 // pred_fallthru
    _
  %v32 = vld [vmem:[%s0] sm:$0xff]
  %v33 = vld [vmem:[%s0 + $0x8] sm:$0xff]
  %v34 = vld [vmem:[%s0 + $0x10] sm:$0xff]
  %v35 = vld [vmem:[%s0 + $0x18] sm:$0xff]
  %v36 = vld [vmem:[%s0 + $0x20] sm:$0xff]
  %v37 = vld [vmem:[%s0 + $0x28] sm:$0xff]
  %v38 = vld [vmem:[%s0 + $0x30] sm:$0xff]
  %v39 = vld [vmem:[%s0 + $0x38] sm:$0xff]
  %v40 = vld [vmem:[%s0 + $0x40] sm:$0xff]
  %v41 = vld [vmem:[%s0 + $0x48] sm:$0xff]
  %v42 = vld [vmem:[%s0 + $0x50] sm:$0xff]
  %v43 = vld [vmem:[%s0 + $0x58] sm:$0xff]
  %v44 = vld [vmem:[%s1] sm:$0xff]
  %v45 = vld [vmem:[%s1 + $0x8] sm:$0xff]
  %v46 = vld [vmem:[%s1 + $0x10] sm:$0xff]
  %v47 = vld [vmem:[%s2] sm:$0x1]
  %v49 = vlaneseq
  %v50 = vshrl.u32 %v49, 7
  %v51 = vsub.s32 0, %v50
  %v52 = vrot.slane %v47, %v51
  %vm54 = vcmask 195584
  %v56 = vsel %vm54, %v32, 0
  %v59 = vsel %vm54, %v33, 0
  %v62 = vsel %vm54, %v34, 0
  %v65 = vsel %vm54, %v35, 0
  %v68 = vsel %vm54, %v36, 0
  %v71 = vsel %vm54, %v37, 0
  %v74 = vsel %vm54, %v38, 0
  %v77 = vsel %vm54, %v39, 0
  %v80 = vsel %vm54, %v40, 0
  %v83 = vsel %vm54, %v41, 0
  %v86 = vsel %vm54, %v42, 0
  %v89 = vsel %vm54, %v43, 0
  %91 = vmatprep.subr.mxu0 0.0
  %92 = vmatpush1.msra.mxu0 %v44
  %93 = vmatprep.subr.mxu0 0.0
  %94 = vmatpush1.msra.mxu0 %v45
  %95 = vmatprep.subr.mxu0 0.0
  %96 = vmatpush1.msra.mxu0 %v46
  %97 = vmatprep.subr.mxu0 0.0
  %98 = vmatpush1.msra.mxu0 0.0
  %99 = vmatprep.subr.mxu0 0.0
  %100 = vmatpush1.msra.mxu0 0.0
  %101 = vmatprep.subr.mxu0 0.0
  %102 = vmatpush1.msra.mxu0 0.0
  %103 = vmatprep.subr.mxu0 0.0
  %104 = vmatpush1.msra.mxu0 0.0
  %105 = vmatprep.subr.mxu0 0.0
  %106 = vmatpush1.msra.mxu0 0.0
  %107 = vmatprep.subr.mxu0 0.0
  %108 = vmatpush1.msra.mxu0 0.0
  %109 = vmatprep.subr.mxu0 0.0
  %110 = vmatpush1.msra.mxu0 0.0
  %111 = vmatprep.subr.mxu0 0.0
  %112 = vmatpush1.msra.mxu0 0.0
  %113 = vmatprep.subr.mxu0 0.0
  %114 = vmatpush1.msra.mxu0 0.0
  %115 = vmatprep.subr.mxu0 0.0
  %116 = vmatpush1.msra.mxu0 0.0
  %117 = vmatprep.subr.mxu0 0.0
  %118 = vmatpush1.msra.mxu0 0.0
  %119 = vmatprep.subr.mxu0 0.0
  %120 = vmatpush1.msra.mxu0 0.0
  %121 = vmatprep.subr.mxu0 0.0
  %122 = vmatpush1.msra.mxu0 0.0
  %123 = vmatprep.subr.mxu0 0.0
  %124 = vmatpush1.msra.mxu0 0.0
  %125 = vmatprep.subr.mxu0 0.0
  %126 = vmatpush1.msra.mxu0 0.0
  %127 = vmatprep.subr.mxu0 0.0
  %128 = vmatpush1.msra.mxu0 0.0
  %129 = vmatprep.subr.mxu0 0.0
  %130 = vmatpush1.msra.mxu0 0.0
  %131 = vmatprep.subr.mxu0 0.0
  %132 = vmatpush1.msra.mxu0 0.0
  %133 = vmatprep.subr.mxu0 0.0
  %134 = vmatpush1.msra.mxu0 0.0
  %135 = vmatprep.subr.mxu0 0.0
  %136 = vmatpush1.msra.mxu0 0.0
  %137 = vmatprep.subr.mxu0 0.0
  %138 = vmatpush1.msra.mxu0 0.0
  %139 = vmatprep.subr.mxu0 0.0
  %140 = vmatpush1.msra.mxu0 0.0
  %141 = vmatprep.subr.mxu0 0.0
  %142 = vmatpush1.msra.mxu0 0.0
  %143 = vmatprep.subr.mxu0 0.0
  %144 = vmatpush1.msra.mxu0 0.0
  %145 = vmatprep.subr.mxu0 0.0
  %146 = vmatpush1.msra.mxu0 0.0
  %147 = vmatprep.subr.mxu0 0.0
  %148 = vmatpush1.msra.mxu0 0.0
  %149 = vmatprep.subr.mxu0 0.0
  %150 = vmatpush1.msra.mxu0 0.0
  %151 = vmatprep.subr.mxu0 0.0
  %152 = vmatpush1.msra.mxu0 0.0
  %153 = vmatprep.subr.mxu0 0.0
  %154 = vmatpush1.msra.mxu0 0.0
  %155 = vmatprep.mubr.f32.mxu0 0.0
  %156 = vmatmul.mubr.f32.gmra.mrb[0].mxu0 %v56
  %v157 = vpop.f32.mrb[0].mxu0
  %v158 = vadd.f32 %v52, %v157
  %v159 = vpop.f32.mrb[0].mxu0
  %160 = vmatprep.mubr.f32.mxu0 0.0
  %161 = vmatmul.mubr.f32.gmra.mrb[0].mxu0 %v59
  %v162 = vpop.f32.mrb[0].mxu0
  %v163 = vadd.f32 %v52, %v162
  %v164 = vpop.f32.mrb[0].mxu0
  %165 = vmatprep.mubr.f32.mxu0 0.0
  %166 = vmatmul.mubr.f32.gmra.mrb[0].mxu0 %v62
  %v167 = vpop.f32.mrb[0].mxu0
  %v168 = vadd.f32 %v52, %v167
  %v169 = vpop.f32.mrb[0].mxu0
  %170 = vmatprep.mubr.f32.mxu0 0.0
  %171 = vmatmul.mubr.f32.gmra.mrb[0].mxu0 %v65
  %v172 = vpop.f32.mrb[0].mxu0
  %v173 = vadd.f32 %v52, %v172
  %v174 = vpop.f32.mrb[0].mxu0
  %175 = vmatprep.mubr.f32.mxu0 0.0
  %176 = vmatmul.mubr.f32.gmra.mrb[0].mxu0 %v68
  %v177 = vpop.f32.mrb[0].mxu0
  %v178 = vadd.f32 %v52, %v177
  %v179 = vpop.f32.mrb[0].mxu0
  %180 = vmatprep.mubr.f32.mxu0 0.0
  %181 = vmatmul.mubr.f32.gmra.mrb[0].mxu0 %v71
  %v182 = vpop.f32.mrb[0].mxu0
  %v183 = vadd.f32 %v52, %v182
  %v184 = vpop.f32.mrb[0].mxu0
  %185 = vmatprep.mubr.f32.mxu0 0.0
  %186 = vmatmul.mubr.f32.gmra.mrb[0].mxu0 %v74
  %v187 = vpop.f32.mrb[0].mxu0
  %v188 = vadd.f32 %v52, %v187
  %v189 = vpop.f32.mrb[0].mxu0
  %190 = vmatprep.mubr.f32.mxu0 0.0
  %191 = vmatmul.mubr.f32.gmra.mrb[0].mxu0 %v77
  %v192 = vpop.f32.mrb[0].mxu0
  %v193 = vadd.f32 %v52, %v192
  %v194 = vpop.f32.mrb[0].mxu0
  %195 = vmatprep.mubr.f32.mxu0 0.0
  %196 = vmatmul.mubr.f32.gmra.mrb[0].mxu0 %v80
  %v197 = vpop.f32.mrb[0].mxu0
  %v198 = vadd.f32 %v52, %v197
  %v199 = vpop.f32.mrb[0].mxu0
  %200 = vmatprep.mubr.f32.mxu0 0.0
  %201 = vmatmul.mubr.f32.gmra.mrb[0].mxu0 %v83
  %v202 = vpop.f32.mrb[0].mxu0
  %v203 = vadd.f32 %v52, %v202
  %v204 = vpop.f32.mrb[0].mxu0
  %205 = vmatprep.mubr.f32.mxu0 0.0
  %206 = vmatmul.mubr.f32.gmra.mrb[0].mxu0 %v86
  %v207 = vpop.f32.mrb[0].mxu0
  %v208 = vadd.f32 %v52, %v207
  %v209 = vpop.f32.mrb[0].mxu0
  %210 = vmatprep.mubr.f32.mxu0 0.0
  %211 = vmatmul.mubr.f32.gmra.mrb[0].mxu0 %v89
  %v212 = vpop.f32.mrb[0].mxu0
  %v213 = vadd.f32 %v52, %v212
  %v214 = vpop.f32.mrb[0].mxu0
  %215 = vdwg.mxu0
  %v216 = vmax.f32 %v158, 0.0
  %v217 = vmax.f32 %v163, 0.0
  %v218 = vmax.f32 %v168, 0.0
  %v219 = vmax.f32 %v173, 0.0
  %v220 = vmax.f32 %v178, 0.0
  %v221 = vmax.f32 %v183, 0.0
  %v222 = vmax.f32 %v188, 0.0
  %v223 = vmax.f32 %v193, 0.0
  %v224 = vmax.f32 %v198, 0.0
  %v225 = vmax.f32 %v203, 0.0
  %v226 = vmax.f32 %v208, 0.0
  %v227 = vmax.f32 %v213, 0.0
  %v228 = vlaneseq
  %v229 = vshrl.u32 %v228, 7
  %v230 = vadd.s32 %v229, 8
  %v231 = vadd.s32 %v229, 16
  %v232 = vadd.s32 %v229, 24
  %v233 = vadd.s32 %v229, 32
  %v234 = vadd.s32 %v229, 40
  %v235 = vadd.s32 %v229, 48
  %v236 = vadd.s32 %v229, 56
  %v237 = vadd.s32 %v229, 64
  %v238 = vadd.s32 %v229, 72
  %v239 = vadd.s32 %v229, 80
  %v240 = vadd.s32 %v229, 88
  %vm241 = vcmp.lt.s32.totalorder %v229, 0
  %v242 = vsub.s32 0, %v229
  %v243 = vsel %vm241, %v242, %v229
  %v244 = vshrl.u32 %v243, 4
  %v245 = vand.u32 %v243, 15
  %v246 = vsub.s32 0, %v245
  %v247 = vsel %vm241, %v246, %v245
  %vm248 = vcmp.lt.s32.totalorder %v230, 0
  %v249 = vsub.s32 0, %v230
  %v250 = vsel %vm248, %v249, %v230
  %v251 = vshrl.u32 %v250, 4
  %v252 = vand.u32 %v250, 15
  %v253 = vsub.s32 0, %v252
  %v254 = vsel %vm248, %v253, %v252
  %vm255 = vcmp.lt.s32.totalorder %v231, 0
  %v256 = vsub.s32 0, %v231
  %v257 = vsel %vm255, %v256, %v231
  %v258 = vshrl.u32 %v257, 4
  %v259 = vand.u32 %v257, 15
  %v260 = vsub.s32 0, %v259
  %v261 = vsel %vm255, %v260, %v259
  %vm262 = vcmp.lt.s32.totalorder %v232, 0
  %v263 = vsub.s32 0, %v232
  %v264 = vsel %vm262, %v263, %v232
  %v265 = vshrl.u32 %v264, 4
  %v266 = vand.u32 %v264, 15
  %v267 = vsub.s32 0, %v266
  %v268 = vsel %vm262, %v267, %v266
  %vm269 = vcmp.lt.s32.totalorder %v233, 0
  %v270 = vsub.s32 0, %v233
  %v271 = vsel %vm269, %v270, %v233
  %v272 = vshrl.u32 %v271, 4
  %v273 = vand.u32 %v271, 15
  %v274 = vsub.s32 0, %v273
  %v275 = vsel %vm269, %v274, %v273
  %vm276 = vcmp.lt.s32.totalorder %v234, 0
  %v277 = vsub.s32 0, %v234
  %v278 = vsel %vm276, %v277, %v234
  %v279 = vshrl.u32 %v278, 4
  %v280 = vand.u32 %v278, 15
  %v281 = vsub.s32 0, %v280
  %v282 = vsel %vm276, %v281, %v280
  %vm283 = vcmp.lt.s32.totalorder %v235, 0
  %v284 = vsub.s32 0, %v235
  %v285 = vsel %vm283, %v284, %v235
  %v286 = vshrl.u32 %v285, 4
  %v287 = vand.u32 %v285, 15
  %v288 = vsub.s32 0, %v287
  %v289 = vsel %vm283, %v288, %v287
  %vm290 = vcmp.lt.s32.totalorder %v236, 0
  %v291 = vsub.s32 0, %v236
  %v292 = vsel %vm290, %v291, %v236
  %v293 = vshrl.u32 %v292, 4
  %v294 = vand.u32 %v292, 15
  %v295 = vsub.s32 0, %v294
  %v296 = vsel %vm290, %v295, %v294
  %vm297 = vcmp.lt.s32.totalorder %v237, 0
  %v298 = vsub.s32 0, %v237
  %v299 = vsel %vm297, %v298, %v237
  %v300 = vshrl.u32 %v299, 4
  %v301 = vand.u32 %v299, 15
  %v302 = vsub.s32 0, %v301
  %v303 = vsel %vm297, %v302, %v301
  %vm304 = vcmp.lt.s32.totalorder %v238, 0
  %v305 = vsub.s32 0, %v238
  %v306 = vsel %vm304, %v305, %v238
  %v307 = vshrl.u32 %v306, 4
  %v308 = vand.u32 %v306, 15
  %v309 = vsub.s32 0, %v308
  %v310 = vsel %vm304, %v309, %v308
  %vm311 = vcmp.lt.s32.totalorder %v239, 0
  %v312 = vsub.s32 0, %v239
  %v313 = vsel %vm311, %v312, %v239
  %v314 = vshrl.u32 %v313, 4
  %v315 = vand.u32 %v313, 15
  %v316 = vsub.s32 0, %v315
  %v317 = vsel %vm311, %v316, %v315
  %vm318 = vcmp.lt.s32.totalorder %v240, 0
  %v319 = vsub.s32 0, %v240
  %v320 = vsel %vm318, %v319, %v240
  %v321 = vshrl.u32 %v320, 4
  %v322 = vand.u32 %v320, 15
  %v323 = vsub.s32 0, %v322
  %v324 = vsel %vm318, %v323, %v322
  %vm325 = vcmp.ne.s32.totalorder %v247, 0
  %vm326 = vcmp.ne.s32.totalorder %v254, 0
  %vm327 = vcmp.ne.s32.totalorder %v261, 0
  %vm328 = vcmp.ne.s32.totalorder %v268, 0
  %vm329 = vcmp.ne.s32.totalorder %v275, 0
  %vm330 = vcmp.ne.s32.totalorder %v282, 0
  %vm331 = vcmp.ne.s32.totalorder %v289, 0
  %vm332 = vcmp.ne.s32.totalorder %v296, 0
  %vm333 = vcmp.ne.s32.totalorder %v303, 0
  %vm334 = vcmp.ne.s32.totalorder %v310, 0
  %vm335 = vcmp.ne.s32.totalorder %v317, 0
  %vm336 = vcmp.ne.s32.totalorder %v324, 0
  %vm337 = vcmp.lt.s32.totalorder %v247, 0
  %vm338 = vcmp.lt.s32.totalorder %v254, 0
  %vm339 = vcmp.lt.s32.totalorder %v261, 0
  %vm340 = vcmp.lt.s32.totalorder %v268, 0
  %vm341 = vcmp.lt.s32.totalorder %v275, 0
  %vm342 = vcmp.lt.s32.totalorder %v282, 0
  %vm343 = vcmp.lt.s32.totalorder %v289, 0
  %vm344 = vcmp.lt.s32.totalorder %v296, 0
  %vm345 = vcmp.lt.s32.totalorder %v303, 0
  %vm346 = vcmp.lt.s32.totalorder %v310, 0
  %vm347 = vcmp.lt.s32.totalorder %v317, 0
  %vm348 = vcmp.lt.s32.totalorder %v324, 0
  %vm349 = vmand %vm337, %vm325
  %vm350 = vmand %vm338, %vm326
  %vm351 = vmand %vm339, %vm327
  %vm352 = vmand %vm340, %vm328
  %vm353 = vmand %vm341, %vm329
  %vm354 = vmand %vm342, %vm330
  %vm355 = vmand %vm343, %vm331
  %vm356 = vmand %vm344, %vm332
  %vm357 = vmand %vm345, %vm333
  %vm358 = vmand %vm346, %vm334
  %vm359 = vmand %vm347, %vm335
  %vm360 = vmand %vm348, %vm336
  %v361 = vadd.s32 %v247, 16
  %v362 = vadd.s32 %v254, 16
  %v363 = vadd.s32 %v261, 16
  %v364 = vadd.s32 %v268, 16
  %v365 = vadd.s32 %v275, 16
  %v366 = vadd.s32 %v282, 16
  %v367 = vadd.s32 %v289, 16
  %v368 = vadd.s32 %v296, 16
  %v369 = vadd.s32 %v303, 16
  %v370 = vadd.s32 %v310, 16
  %v371 = vadd.s32 %v317, 16
  %v372 = vadd.s32 %v324, 16
  %v373 = vsel %vm349, %v361, %v247
  %v374 = vsel %vm350, %v362, %v254
  %v375 = vsel %vm351, %v363, %v261
  %v376 = vsel %vm352, %v364, %v268
  %v377 = vsel %vm353, %v365, %v275
  %v378 = vsel %vm354, %v366, %v282
  %v379 = vsel %vm355, %v367, %v289
  %v380 = vsel %vm356, %v368, %v296
  %v381 = vsel %vm357, %v369, %v303
  %v382 = vsel %vm358, %v370, %v310
  %v383 = vsel %vm359, %v371, %v317
  %v384 = vsel %vm360, %v372, %v324
  %vm385 = vcmp.ge.s32.totalorder %v373, 3
  %vm386 = vcmp.ge.s32.totalorder %v374, 3
  %vm387 = vcmp.ge.s32.totalorder %v375, 3
  %vm388 = vcmp.ge.s32.totalorder %v376, 3
  %vm389 = vcmp.ge.s32.totalorder %v377, 3
  %vm390 = vcmp.ge.s32.totalorder %v378, 3
  %vm391 = vcmp.ge.s32.totalorder %v379, 3
  %vm392 = vcmp.ge.s32.totalorder %v380, 3
  %vm393 = vcmp.ge.s32.totalorder %v381, 3
  %vm394 = vcmp.ge.s32.totalorder %v382, 3
  %vm395 = vcmp.ge.s32.totalorder %v383, 3
  %vm396 = vcmp.ge.s32.totalorder %v384, 3
  %vm397 = vcmp.ge.s32.totalorder %v373, 2
  %vm398 = vcmp.ge.s32.totalorder %v374, 2
  %vm399 = vcmp.ge.s32.totalorder %v375, 2
  %vm400 = vcmp.ge.s32.totalorder %v376, 2
  %vm401 = vcmp.ge.s32.totalorder %v377, 2
  %vm402 = vcmp.ge.s32.totalorder %v378, 2
  %vm403 = vcmp.ge.s32.totalorder %v379, 2
  %vm404 = vcmp.ge.s32.totalorder %v380, 2
  %vm405 = vcmp.ge.s32.totalorder %v381, 2
  %vm406 = vcmp.ge.s32.totalorder %v382, 2
  %vm407 = vcmp.ge.s32.totalorder %v383, 2
  %vm408 = vcmp.ge.s32.totalorder %v384, 2
  %vm409 = vcmp.ge.s32.totalorder %v373, 1
  %vm410 = vcmp.ge.s32.totalorder %v374, 1
  %vm411 = vcmp.ge.s32.totalorder %v375, 1
  %vm412 = vcmp.ge.s32.totalorder %v376, 1
  %vm413 = vcmp.ge.s32.totalorder %v377, 1
  %vm414 = vcmp.ge.s32.totalorder %v378, 1
  %vm415 = vcmp.ge.s32.totalorder %v379, 1
  %vm416 = vcmp.ge.s32.totalorder %v380, 1
  %vm417 = vcmp.ge.s32.totalorder %v381, 1
  %vm418 = vcmp.ge.s32.totalorder %v382, 1
  %vm419 = vcmp.ge.s32.totalorder %v383, 1
  %vm420 = vcmp.ge.s32.totalorder %v384, 1
  %vm421 = vcmp.lt.s32.totalorder %v373, 15
  %vm422 = vcmp.lt.s32.totalorder %v374, 15
  %vm423 = vcmp.lt.s32.totalorder %v375, 15
  %vm424 = vcmp.lt.s32.totalorder %v376, 15
  %vm425 = vcmp.lt.s32.totalorder %v377, 15
  %vm426 = vcmp.lt.s32.totalorder %v378, 15
  %vm427 = vcmp.lt.s32.totalorder %v379, 15
  %vm428 = vcmp.lt.s32.totalorder %v380, 15
  %vm429 = vcmp.lt.s32.totalorder %v381, 15
  %vm430 = vcmp.lt.s32.totalorder %v382, 15
  %vm431 = vcmp.lt.s32.totalorder %v383, 15
  %vm432 = vcmp.lt.s32.totalorder %v384, 15
  %v433 = vld [vmem:[%s3] sm:$0xff]
  %v434 = vld [vmem:[%s3 + $0x8] sm:$0xff]
  %v435 = vld [vmem:[%s3 + $0x10] sm:$0xff]
  %v436 = vld [vmem:[%s3 + $0x18] sm:$0xff]
  %v437 = vld [vmem:[%s4] sm:$0x1f]
  %v438 = vld [vmem:[%s5] sm:$0xff]
  %v439 = vld [vmem:[%s5 + $0x8] sm:$0xff]
  %v440 = vld [vmem:[%s6] sm:$0x1]
  %vm441 = vcmask 261120
  %v443 = vsel %vm441, %v216, 0
  %v446 = vsel %vm441, %v217, 0
  %v449 = vsel %vm441, %v218, 0
  %v452 = vsel %vm441, %v219, 0
  %v455 = vsel %vm441, %v220, 0
  %v458 = vsel %vm441, %v221, 0
  %v461 = vsel %vm441, %v222, 0
  %v464 = vsel %vm441, %v223, 0
  %v467 = vsel %vm441, %v224, 0
  %v470 = vsel %vm441, %v225, 0
  %v473 = vsel %vm441, %v226, 0
  %v476 = vsel %vm441, %v227, 0
  %478 = vmatprep.subr.mxu0 0.0
  %479 = vmatpush1.msra.mxu0 %v433
  %480 = vmatprep.subr.mxu0 0.0
  %481 = vmatpush1.msra.mxu0 %v434
  %482 = vmatprep.subr.mxu0 0.0
  %483 = vmatpush1.msra.mxu0 %v435
  %484 = vmatprep.subr.mxu0 0.0
  %485 = vmatpush1.msra.mxu0 %v436
  %486 = vmatprep.subr.mxu0 0.0
  %487 = vmatpush1.msra.mxu0 0.0
  %488 = vmatprep.subr.mxu0 0.0
  %489 = vmatpush1.msra.mxu0 0.0
  %490 = vmatprep.subr.mxu0 0.0
  %491 = vmatpush1.msra.mxu0 0.0
  %492 = vmatprep.subr.mxu0 0.0
  %493 = vmatpush1.msra.mxu0 0.0
  %494 = vmatprep.subr.mxu0 0.0
  %495 = vmatpush1.msra.mxu0 0.0
  %496 = vmatprep.subr.mxu0 0.0
  %497 = vmatpush1.msra.mxu0 0.0
  %498 = vmatprep.subr.mxu0 0.0
  %499 = vmatpush1.msra.mxu0 0.0
  %500 = vmatprep.subr.mxu0 0.0
  %501 = vmatpush1.msra.mxu0 0.0
  %502 = vmatprep.subr.mxu0 0.0
  %503 = vmatpush1.msra.mxu0 0.0
  %504 = vmatprep.subr.mxu0 0.0
  %505 = vmatpush1.msra.mxu0 0.0
  %506 = vmatprep.subr.mxu0 0.0
  %507 = vmatpush1.msra.mxu0 0.0
  %508 = vmatprep.subr.mxu0 0.0
  %509 = vmatpush1.msra.mxu0 0.0
  %510 = vmatprep.subr.mxu0 0.0
  %511 = vmatpush1.msra.mxu0 0.0
  %512 = vmatprep.subr.mxu0 0.0
  %513 = vmatpush1.msra.mxu0 0.0
  %514 = vmatprep.subr.mxu0 0.0
  %515 = vmatpush1.msra.mxu0 0.0
  %516 = vmatprep.subr.mxu0 0.0
  %517 = vmatpush1.msra.mxu0 0.0
  %518 = vmatprep.subr.mxu0 0.0
  %519 = vmatpush1.msra.mxu0 0.0
  %520 = vmatprep.subr.mxu0 0.0
  %521 = vmatpush1.msra.mxu0 0.0
  %522 = vmatprep.subr.mxu0 0.0
  %523 = vmatpush1.msra.mxu0 0.0
  %524 = vmatprep.subr.mxu0 0.0
  %525 = vmatpush1.msra.mxu0 0.0
  %526 = vmatprep.subr.mxu0 0.0
  %527 = vmatpush1.msra.mxu0 0.0
  %528 = vmatprep.subr.mxu0 0.0
  %529 = vmatpush1.msra.mxu0 0.0
  %530 = vmatprep.subr.mxu0 0.0
  %531 = vmatpush1.msra.mxu0 0.0
  %532 = vmatprep.subr.mxu0 0.0
  %533 = vmatpush1.msra.mxu0 0.0
  %534 = vmatprep.subr.mxu0 0.0
  %535 = vmatpush1.msra.mxu0 0.0
  %536 = vmatprep.subr.mxu0 0.0
  %537 = vmatpush1.msra.mxu0 0.0
  %538 = vmatprep.subr.mxu0 0.0
  %539 = vmatpush1.msra.mxu0 0.0
  %540 = vmatprep.subr.mxu0 0.0
  %541 = vmatpush1.msra.mxu0 0.0
  %542 = vmatprep.mubr.f32.mxu0 0.0
  %543 = vmatmul.mubr.f32.gmra.mrb[0].mxu0 %v443
  %v544 = vpop.f32.mrb[0].mxu0
  %v545 = vadd.f32 0.0, %v544
  %v546 = vpop.f32.mrb[0].mxu0
  %547 = vmatprep.mubr.f32.mxu0 0.0
  %548 = vmatmul.mubr.f32.gmra.mrb[0].mxu0 %v446
  %v549 = vpop.f32.mrb[0].mxu0
  %v550 = vadd.f32 0.0, %v549
  %v551 = vpop.f32.mrb[0].mxu0
  %552 = vmatprep.mubr.f32.mxu0 0.0
  %553 = vmatmul.mubr.f32.gmra.mrb[0].mxu0 %v449
  %v554 = vpop.f32.mrb[0].mxu0
  %v555 = vadd.f32 0.0, %v554
  %v556 = vpop.f32.mrb[0].mxu0
  %557 = vmatprep.mubr.f32.mxu0 0.0
  %558 = vmatmul.mubr.f32.gmra.mrb[0].mxu0 %v452
  %v559 = vpop.f32.mrb[0].mxu0
  %v560 = vadd.f32 0.0, %v559
  %v561 = vpop.f32.mrb[0].mxu0
  %562 = vmatprep.mubr.f32.mxu0 0.0
  %563 = vmatmul.mubr.f32.gmra.mrb[0].mxu0 %v455
  %v564 = vpop.f32.mrb[0].mxu0
  %v565 = vadd.f32 0.0, %v564
  %v566 = vpop.f32.mrb[0].mxu0
  %567 = vmatprep.mubr.f32.mxu0 0.0
  %568 = vmatmul.mubr.f32.gmra.mrb[0].mxu0 %v458
  %v569 = vpop.f32.mrb[0].mxu0
  %v570 = vadd.f32 0.0, %v569
  %v571 = vpop.f32.mrb[0].mxu0
  %572 = vmatprep.mubr.f32.mxu0 0.0
  %573 = vmatmul.mubr.f32.gmra.mrb[0].mxu0 %v461
  %v574 = vpop.f32.mrb[0].mxu0
  %v575 = vadd.f32 0.0, %v574
  %v576 = vpop.f32.mrb[0].mxu0
  %577 = vmatprep.mubr.f32.mxu0 0.0
  %578 = vmatmul.mubr.f32.gmra.mrb[0].mxu0 %v464
  %v579 = vpop.f32.mrb[0].mxu0
  %v580 = vadd.f32 0.0, %v579
  %v581 = vpop.f32.mrb[0].mxu0
  %582 = vmatprep.mubr.f32.mxu0 0.0
  %583 = vmatmul.mubr.f32.gmra.mrb[0].mxu0 %v467
  %v584 = vpop.f32.mrb[0].mxu0
  %v585 = vadd.f32 0.0, %v584
  %v586 = vpop.f32.mrb[0].mxu0
  %587 = vmatprep.mubr.f32.mxu0 0.0
  %588 = vmatmul.mubr.f32.gmra.mrb[0].mxu0 %v470
  %v589 = vpop.f32.mrb[0].mxu0
  %v590 = vadd.f32 0.0, %v589
  %v591 = vpop.f32.mrb[0].mxu0
  %592 = vmatprep.mubr.f32.mxu0 0.0
  %593 = vmatmul.mubr.f32.gmra.mrb[0].mxu0 %v473
  %v594 = vpop.f32.mrb[0].mxu0
  %v595 = vadd.f32 0.0, %v594
  %v596 = vpop.f32.mrb[0].mxu0
  %597 = vmatprep.mubr.f32.mxu0 0.0
  %598 = vmatmul.mubr.f32.gmra.mrb[0].mxu0 %v476
  %v599 = vpop.f32.mrb[0].mxu0
  %v600 = vadd.f32 0.0, %v599
  %v601 = vpop.f32.mrb[0].mxu0
  %602 = vdwg.mxu0
  %v603 = vlaneseq
  %v604 = vshrl.u32 %v603, 7
  %v605 = vsub.s32 3, %v604
  %v606 = vrot.slane %v437, %v605
  %v607 = vmul.f32 %v545, %v606
  %v608 = vmul.f32 %v550, %v606
  %v609 = vmul.f32 %v555, %v606
  %v610 = vmul.f32 %v560, %v606
  %v611 = vmul.f32 %v565, %v606
  %v612 = vmul.f32 %v570, %v606
  %v613 = vmul.f32 %v575, %v606
  %v614 = vmul.f32 %v580, %v606
  %v615 = vmul.f32 %v585, %v606
  %v616 = vmul.f32 %v590, %v606
  %v617 = vmul.f32 %v595, %v606
  %v618 = vmul.f32 %v600, %v606
  %v619 = vrot.slane %v545, 5
  %v620 = vrot.slane %v550, 5
  %v621 = vrot.slane %v555, 5
  %v622 = vrot.slane %v560, 5
  %v623 = vrot.slane %v565, 5
  %v624 = vrot.slane %v570, 5
  %v625 = vrot.slane %v575, 5
  %v626 = vrot.slane %v580, 5
  %v627 = vrot.slane %v585, 5
  %v628 = vrot.slane %v590, 5
  %v629 = vrot.slane %v595, 5
  %v630 = vrot.slane %v600, 5
  %vm631 = vcmp.lt.s32.totalorder %v229, 3
  %v632 = vsel %vm631, %v629, %v630
  %v633 = vsel %vm631, %v628, %v629
  %v634 = vsel %vm631, %v627, %v628
  %v635 = vsel %vm631, %v626, %v627
  %v636 = vsel %vm631, %v625, %v626
  %v637 = vsel %vm631, %v624, %v625
  %v638 = vsel %vm631, %v623, %v624
  %v639 = vsel %vm631, %v622, %v623
  %v640 = vsel %vm631, %v621, %v622
  %v641 = vsel %vm631, %v620, %v621
  %v642 = vsel %vm631, %v619, %v620
  %v643 = vsel %vm631, %v630, %v619
  %v644 = vsel %vm385, %v643, 0.0
  %v645 = vsel %vm386, %v642, 0.0
  %v646 = vsel %vm387, %v641, 0.0
  %v647 = vsel %vm388, %v640, 0.0
  %v648 = vsel %vm389, %v639, 0.0
  %v649 = vsel %vm390, %v638, 0.0
  %v650 = vsel %vm391, %v637, 0.0
  %v651 = vsel %vm392, %v636, 0.0
  %v652 = vsel %vm393, %v635, 0.0
  %v653 = vsel %vm394, %v634, 0.0
  %v654 = vsel %vm395, %v633, 0.0
  %v655 = vsel %vm396, %v632, 0.0
  %v656 = vlaneseq
  %v657 = vshrl.u32 %v656, 7
  %v658 = vsub.s32 0, %v657
  %v659 = vrot.slane %v437, %v658
  %v660 = vmul.f32 %v644, %v659
  %v661 = vmul.f32 %v645, %v659
  %v662 = vmul.f32 %v646, %v659
  %v663 = vmul.f32 %v647, %v659
  %v664 = vmul.f32 %v648, %v659
  %v665 = vmul.f32 %v649, %v659
  %v666 = vmul.f32 %v650, %v659
  %v667 = vmul.f32 %v651, %v659
  %v668 = vmul.f32 %v652, %v659
  %v669 = vmul.f32 %v653, %v659
  %v670 = vmul.f32 %v654, %v659
  %v671 = vmul.f32 %v655, %v659
  %v672 = vadd.f32 %v607, %v660
  %v673 = vadd.f32 %v608, %v661
  %v674 = vadd.f32 %v609, %v662
  %v675 = vadd.f32 %v610, %v663
  %v676 = vadd.f32 %v611, %v664
  %v677 = vadd.f32 %v612, %v665
  %v678 = vadd.f32 %v613, %v666
  %v679 = vadd.f32 %v614, %v667
  %v680 = vadd.f32 %v615, %v668
  %v681 = vadd.f32 %v616, %v669
  %v682 = vadd.f32 %v617, %v670
  %v683 = vadd.f32 %v618, %v671
  %v684 = vrot.slane %v545, 6
  %v685 = vrot.slane %v550, 6
  %v686 = vrot.slane %v555, 6
  %v687 = vrot.slane %v560, 6
  %v688 = vrot.slane %v565, 6
  %v689 = vrot.slane %v570, 6
  %v690 = vrot.slane %v575, 6
  %v691 = vrot.slane %v580, 6
  %v692 = vrot.slane %v585, 6
  %v693 = vrot.slane %v590, 6
  %v694 = vrot.slane %v595, 6
  %v695 = vrot.slane %v600, 6
  %vm696 = vcmp.lt.s32.totalorder %v229, 2
  %v697 = vsel %vm696, %v694, %v695
  %v698 = vsel %vm696, %v693, %v694
  %v699 = vsel %vm696, %v692, %v693
  %v700 = vsel %vm696, %v691, %v692
  %v701 = vsel %vm696, %v690, %v691
  %v702 = vsel %vm696, %v689, %v690
  %v703 = vsel %vm696, %v688, %v689
  %v704 = vsel %vm696, %v687, %v688
  %v705 = vsel %vm696, %v686, %v687
  %v706 = vsel %vm696, %v685, %v686
  %v707 = vsel %vm696, %v684, %v685
  %v708 = vsel %vm696, %v695, %v684
  %v709 = vsel %vm397, %v708, 0.0
  %v710 = vsel %vm398, %v707, 0.0
  %v711 = vsel %vm399, %v706, 0.0
  %v712 = vsel %vm400, %v705, 0.0
  %v713 = vsel %vm401, %v704, 0.0
  %v714 = vsel %vm402, %v703, 0.0
  %v715 = vsel %vm403, %v702, 0.0
  %v716 = vsel %vm404, %v701, 0.0
  %v717 = vsel %vm405, %v700, 0.0
  %v718 = vsel %vm406, %v699, 0.0
  %v719 = vsel %vm407, %v698, 0.0
  %v720 = vsel %vm408, %v697, 0.0
  %v721 = vlaneseq
  %v722 = vshrl.u32 %v721, 7
  %v723 = vsub.s32 1, %v722
  %v724 = vrot.slane %v437, %v723
  %v725 = vmul.f32 %v709, %v724
  %v726 = vmul.f32 %v710, %v724
  %v727 = vmul.f32 %v711, %v724
  %v728 = vmul.f32 %v712, %v724
  %v729 = vmul.f32 %v713, %v724
  %v730 = vmul.f32 %v714, %v724
  %v731 = vmul.f32 %v715, %v724
  %v732 = vmul.f32 %v716, %v724
  %v733 = vmul.f32 %v717, %v724
  %v734 = vmul.f32 %v718, %v724
  %v735 = vmul.f32 %v719, %v724
  %v736 = vmul.f32 %v720, %v724
  %v737 = vadd.f32 %v672, %v725
  %v738 = vadd.f32 %v673, %v726
  %v739 = vadd.f32 %v674, %v727
  %v740 = vadd.f32 %v675, %v728
  %v741 = vadd.f32 %v676, %v729
  %v742 = vadd.f32 %v677, %v730
  %v743 = vadd.f32 %v678, %v731
  %v744 = vadd.f32 %v679, %v732
  %v745 = vadd.f32 %v680, %v733
  %v746 = vadd.f32 %v681, %v734
  %v747 = vadd.f32 %v682, %v735
  %v748 = vadd.f32 %v683, %v736
  %v749 = vrot.slane %v545, 7
  %v750 = vrot.slane %v550, 7
  %v751 = vrot.slane %v555, 7
  %v752 = vrot.slane %v560, 7
  %v753 = vrot.slane %v565, 7
  %v754 = vrot.slane %v570, 7
  %v755 = vrot.slane %v575, 7
  %v756 = vrot.slane %v580, 7
  %v757 = vrot.slane %v585, 7
  %v758 = vrot.slane %v590, 7
  %v759 = vrot.slane %v595, 7
  %v760 = vrot.slane %v600, 7
  %vm761 = vcmp.lt.s32.totalorder %v229, 1
  %v762 = vsel %vm761, %v759, %v760
  %v763 = vsel %vm761, %v758, %v759
  %v764 = vsel %vm761, %v757, %v758
  %v765 = vsel %vm761, %v756, %v757
  %v766 = vsel %vm761, %v755, %v756
  %v767 = vsel %vm761, %v754, %v755
  %v768 = vsel %vm761, %v753, %v754
  %v769 = vsel %vm761, %v752, %v753
  %v770 = vsel %vm761, %v751, %v752
  %v771 = vsel %vm761, %v750, %v751
  %v772 = vsel %vm761, %v749, %v750
  %v773 = vsel %vm761, %v760, %v749
  %v774 = vsel %vm409, %v773, 0.0
  %v775 = vsel %vm410, %v772, 0.0
  %v776 = vsel %vm411, %v771, 0.0
  %v777 = vsel %vm412, %v770, 0.0
  %v778 = vsel %vm413, %v769, 0.0
  %v779 = vsel %vm414, %v768, 0.0
  %v780 = vsel %vm415, %v767, 0.0
  %v781 = vsel %vm416, %v766, 0.0
  %v782 = vsel %vm417, %v765, 0.0
  %v783 = vsel %vm418, %v764, 0.0
  %v784 = vsel %vm419, %v763, 0.0
  %v785 = vsel %vm420, %v762, 0.0
  %v786 = vlaneseq
  %v787 = vshrl.u32 %v786, 7
  %v788 = vsub.s32 2, %v787
  %v789 = vrot.slane %v437, %v788
  %v790 = vmul.f32 %v774, %v789
  %v791 = vmul.f32 %v775, %v789
  %v792 = vmul.f32 %v776, %v789
  %v793 = vmul.f32 %v777, %v789
  %v794 = vmul.f32 %v778, %v789
  %v795 = vmul.f32 %v779, %v789
  %v796 = vmul.f32 %v780, %v789
  %v797 = vmul.f32 %v781, %v789
  %v798 = vmul.f32 %v782, %v789
  %v799 = vmul.f32 %v783, %v789
  %v800 = vmul.f32 %v784, %v789
  %v801 = vmul.f32 %v785, %v789
  %v802 = vadd.f32 %v737, %v790
  %v803 = vadd.f32 %v738, %v791
  %v804 = vadd.f32 %v739, %v792
  %v805 = vadd.f32 %v740, %v793
  %v806 = vadd.f32 %v741, %v794
  %v807 = vadd.f32 %v742, %v795
  %v808 = vadd.f32 %v743, %v796
  %v809 = vadd.f32 %v744, %v797
  %v810 = vadd.f32 %v745, %v798
  %v811 = vadd.f32 %v746, %v799
  %v812 = vadd.f32 %v747, %v800
  %v813 = vadd.f32 %v748, %v801
  %v814 = vrot.slane %v545, 1
  %v815 = vrot.slane %v550, 1
  %v816 = vrot.slane %v555, 1
  %v817 = vrot.slane %v560, 1
  %v818 = vrot.slane %v565, 1
  %v819 = vrot.slane %v570, 1
  %v820 = vrot.slane %v575, 1
  %v821 = vrot.slane %v580, 1
  %v822 = vrot.slane %v585, 1
  %v823 = vrot.slane %v590, 1
  %v824 = vrot.slane %v595, 1
  %v825 = vrot.slane %v600, 1
  %vm826 = vcmp.lt.s32.totalorder %v229, 7
  %v827 = vsel %vm826, %v824, %v825
  %v828 = vsel %vm826, %v823, %v824
  %v829 = vsel %vm826, %v822, %v823
  %v830 = vsel %vm826, %v821, %v822
  %v831 = vsel %vm826, %v820, %v821
  %v832 = vsel %vm826, %v819, %v820
  %v833 = vsel %vm826, %v818, %v819
  %v834 = vsel %vm826, %v817, %v818
  %v835 = vsel %vm826, %v816, %v817
  %v836 = vsel %vm826, %v815, %v816
  %v837 = vsel %vm826, %v814, %v815
  %v838 = vsel %vm826, %v825, %v814
  %v839 = vsel %vm421, %v837, 0.0
  %v840 = vsel %vm422, %v836, 0.0
  %v841 = vsel %vm423, %v835, 0.0
  %v842 = vsel %vm424, %v834, 0.0
  %v843 = vsel %vm425, %v833, 0.0
  %v844 = vsel %vm426, %v832, 0.0
  %v845 = vsel %vm427, %v831, 0.0
  %v846 = vsel %vm428, %v830, 0.0
  %v847 = vsel %vm429, %v829, 0.0
  %v848 = vsel %vm430, %v828, 0.0
  %v849 = vsel %vm431, %v827, 0.0
  %v850 = vsel %vm432, %v838, 0.0
  %v851 = vlaneseq
  %v852 = vshrl.u32 %v851, 7
  %v853 = vsub.s32 4, %v852
  %v854 = vrot.slane %v437, %v853
  %v855 = vmul.f32 %v839, %v854
  %v856 = vmul.f32 %v840, %v854
  %v857 = vmul.f32 %v841, %v854
  %v858 = vmul.f32 %v842, %v854
  %v859 = vmul.f32 %v843, %v854
  %v860 = vmul.f32 %v844, %v854
  %v861 = vmul.f32 %v845, %v854
  %v862 = vmul.f32 %v846, %v854
  %v863 = vmul.f32 %v847, %v854
  %v864 = vmul.f32 %v848, %v854
  %v865 = vmul.f32 %v849, %v854
  %v866 = vmul.f32 %v850, %v854
  %v867 = vadd.f32 %v802, %v855
  %v868 = vadd.f32 %v803, %v856
  %v869 = vadd.f32 %v804, %v857
  %v870 = vadd.f32 %v805, %v858
  %v871 = vadd.f32 %v806, %v859
  %v872 = vadd.f32 %v807, %v860
  %v873 = vadd.f32 %v808, %v861
  %v874 = vadd.f32 %v809, %v862
  %v875 = vadd.f32 %v810, %v863
  %v876 = vadd.f32 %v811, %v864
  %v877 = vadd.f32 %v812, %v865
  %v878 = vadd.f32 %v813, %v866
  %v880 = vlaneseq
  %v881 = vshrl.u32 %v880, 7
  %v882 = vsub.s32 0, %v881
  %v883 = vrot.slane %v440, %v882
  %vm885 = vcmask 130048
  %v887 = vsel %vm885, %v867, 0
  %v890 = vsel %vm885, %v868, 0
  %v893 = vsel %vm885, %v869, 0
  %v896 = vsel %vm885, %v870, 0
  %v899 = vsel %vm885, %v871, 0
  %v902 = vsel %vm885, %v872, 0
  %v905 = vsel %vm885, %v873, 0
  %v908 = vsel %vm885, %v874, 0
  %v911 = vsel %vm885, %v875, 0
  %v914 = vsel %vm885, %v876, 0
  %v917 = vsel %vm885, %v877, 0
  %v920 = vsel %vm885, %v878, 0
  %922 = vmatprep.subr.mxu0 0.0
  %923 = vmatpush1.msra.mxu0 %v438
  %924 = vmatprep.subr.mxu0 0.0
  %925 = vmatpush1.msra.mxu0 %v439
  %926 = vmatprep.subr.mxu0 0.0
  %927 = vmatpush1.msra.mxu0 0.0
  %928 = vmatprep.subr.mxu0 0.0
  %929 = vmatpush1.msra.mxu0 0.0
  %930 = vmatprep.subr.mxu0 0.0
  %931 = vmatpush1.msra.mxu0 0.0
  %932 = vmatprep.subr.mxu0 0.0
  %933 = vmatpush1.msra.mxu0 0.0
  %934 = vmatprep.subr.mxu0 0.0
  %935 = vmatpush1.msra.mxu0 0.0
  %936 = vmatprep.subr.mxu0 0.0
  %937 = vmatpush1.msra.mxu0 0.0
  %938 = vmatprep.subr.mxu0 0.0
  %939 = vmatpush1.msra.mxu0 0.0
  %940 = vmatprep.subr.mxu0 0.0
  %941 = vmatpush1.msra.mxu0 0.0
  %942 = vmatprep.subr.mxu0 0.0
  %943 = vmatpush1.msra.mxu0 0.0
  %944 = vmatprep.subr.mxu0 0.0
  %945 = vmatpush1.msra.mxu0 0.0
  %946 = vmatprep.subr.mxu0 0.0
  %947 = vmatpush1.msra.mxu0 0.0
  %948 = vmatprep.subr.mxu0 0.0
  %949 = vmatpush1.msra.mxu0 0.0
  %950 = vmatprep.subr.mxu0 0.0
  %951 = vmatpush1.msra.mxu0 0.0
  %952 = vmatprep.subr.mxu0 0.0
  %953 = vmatpush1.msra.mxu0 0.0
  %954 = vmatprep.subr.mxu0 0.0
  %955 = vmatpush1.msra.mxu0 0.0
  %956 = vmatprep.subr.mxu0 0.0
  %957 = vmatpush1.msra.mxu0 0.0
  %958 = vmatprep.subr.mxu0 0.0
  %959 = vmatpush1.msra.mxu0 0.0
  %960 = vmatprep.subr.mxu0 0.0
  %961 = vmatpush1.msra.mxu0 0.0
  %962 = vmatprep.subr.mxu0 0.0
  %963 = vmatpush1.msra.mxu0 0.0
  %964 = vmatprep.subr.mxu0 0.0
  %965 = vmatpush1.msra.mxu0 0.0
  %966 = vmatprep.subr.mxu0 0.0
  %967 = vmatpush1.msra.mxu0 0.0
  %968 = vmatprep.subr.mxu0 0.0
  %969 = vmatpush1.msra.mxu0 0.0
  %970 = vmatprep.subr.mxu0 0.0
  %971 = vmatpush1.msra.mxu0 0.0
  %972 = vmatprep.subr.mxu0 0.0
  %973 = vmatpush1.msra.mxu0 0.0
  %974 = vmatprep.subr.mxu0 0.0
  %975 = vmatpush1.msra.mxu0 0.0
  %976 = vmatprep.subr.mxu0 0.0
  %977 = vmatpush1.msra.mxu0 0.0
  %978 = vmatprep.subr.mxu0 0.0
  %979 = vmatpush1.msra.mxu0 0.0
  %980 = vmatprep.subr.mxu0 0.0
  %981 = vmatpush1.msra.mxu0 0.0
  %982 = vmatprep.subr.mxu0 0.0
  %983 = vmatpush1.msra.mxu0 0.0
  %984 = vmatprep.subr.mxu0 0.0
  %985 = vmatpush1.msra.mxu0 0.0
  %986 = vmatprep.mubr.f32.mxu0 0.0
  %987 = vmatmul.mubr.f32.gmra.mrb[0].mxu0 %v887
  %v988 = vpop.f32.mrb[0].mxu0
  %v989 = vadd.f32 %v883, %v988
  %v990 = vpop.f32.mrb[0].mxu0
  %991 = vmatprep.mubr.f32.mxu0 0.0
  %992 = vmatmul.mubr.f32.gmra.mrb[0].mxu0 %v890
  %v993 = vpop.f32.mrb[0].mxu0
  %v994 = vadd.f32 %v883, %v993
  %v995 = vpop.f32.mrb[0].mxu0
  %996 = vmatprep.mubr.f32.mxu0 0.0
  %997 = vmatmul.mubr.f32.gmra.mrb[0].mxu0 %v893
  %v998 = vpop.f32.mrb[0].mxu0
  %v999 = vadd.f32 %v883, %v998
  %v1000 = vpop.f32.mrb[0].mxu0
  %1001 = vmatprep.mubr.f32.mxu0 0.0
  %1002 = vmatmul.mubr.f32.gmra.mrb[0].mxu0 %v896
  %v1003 = vpop.f32.mrb[0].mxu0
  %v1004 = vadd.f32 %v883, %v1003
  %v1005 = vpop.f32.mrb[0].mxu0
  %1006 = vmatprep.mubr.f32.mxu0 0.0
  %1007 = vmatmul.mubr.f32.gmra.mrb[0].mxu0 %v899
  %v1008 = vpop.f32.mrb[0].mxu0
  %v1009 = vadd.f32 %v883, %v1008
  %v1010 = vpop.f32.mrb[0].mxu0
  %1011 = vmatprep.mubr.f32.mxu0 0.0
  %1012 = vmatmul.mubr.f32.gmra.mrb[0].mxu0 %v902
  %v1013 = vpop.f32.mrb[0].mxu0
  %v1014 = vadd.f32 %v883, %v1013
  %v1015 = vpop.f32.mrb[0].mxu0
  %1016 = vmatprep.mubr.f32.mxu0 0.0
  %1017 = vmatmul.mubr.f32.gmra.mrb[0].mxu0 %v905
  %v1018 = vpop.f32.mrb[0].mxu0
  %v1019 = vadd.f32 %v883, %v1018
  %v1020 = vpop.f32.mrb[0].mxu0
  %1021 = vmatprep.mubr.f32.mxu0 0.0
  %1022 = vmatmul.mubr.f32.gmra.mrb[0].mxu0 %v908
  %v1023 = vpop.f32.mrb[0].mxu0
  %v1024 = vadd.f32 %v883, %v1023
  %v1025 = vpop.f32.mrb[0].mxu0
  %1026 = vmatprep.mubr.f32.mxu0 0.0
  %1027 = vmatmul.mubr.f32.gmra.mrb[0].mxu0 %v911
  %v1028 = vpop.f32.mrb[0].mxu0
  %v1029 = vadd.f32 %v883, %v1028
  %v1030 = vpop.f32.mrb[0].mxu0
  %1031 = vmatprep.mubr.f32.mxu0 0.0
  %1032 = vmatmul.mubr.f32.gmra.mrb[0].mxu0 %v914
  %v1033 = vpop.f32.mrb[0].mxu0
  %v1034 = vadd.f32 %v883, %v1033
  %v1035 = vpop.f32.mrb[0].mxu0
  %1036 = vmatprep.mubr.f32.mxu0 0.0
  %1037 = vmatmul.mubr.f32.gmra.mrb[0].mxu0 %v917
  %v1038 = vpop.f32.mrb[0].mxu0
  %v1039 = vadd.f32 %v883, %v1038
  %v1040 = vpop.f32.mrb[0].mxu0
  %1041 = vmatprep.mubr.f32.mxu0 0.0
  %1042 = vmatmul.mubr.f32.gmra.mrb[0].mxu0 %v920
  %v1043 = vpop.f32.mrb[0].mxu0
  %v1044 = vadd.f32 %v883, %v1043
  %v1045 = vpop.f32.mrb[0].mxu0
  %1046 = vdwg.mxu0
  %v1047 = vmax.f32 %v989, 0.0
  %v1048 = vmax.f32 %v994, 0.0
  %v1049 = vmax.f32 %v999, 0.0
  %v1050 = vmax.f32 %v1004, 0.0
  %v1051 = vmax.f32 %v1009, 0.0
  %v1052 = vmax.f32 %v1014, 0.0
  %v1053 = vmax.f32 %v1019, 0.0
  %v1054 = vmax.f32 %v1024, 0.0
  %v1055 = vmax.f32 %v1029, 0.0
  %v1056 = vmax.f32 %v1034, 0.0
  %v1057 = vmax.f32 %v1039, 0.0
  %v1058 = vmax.f32 %v1044, 0.0
  %v1059 = vmax.f32 %v1047, %v1051
  %v1060 = vmax.f32 %v1048, %v1052
  %v1061 = vmax.f32 %v1049, %v1053
  %v1062 = vmax.f32 %v1050, %v1054
  %v1063 = vmax.f32 %v1059, %v1055
  %v1064 = vmax.f32 %v1060, %v1056
  %v1065 = vmax.f32 %v1061, %v1057
  %v1066 = vmax.f32 %v1062, %v1058
  %s1067 = scalar_lea.vmem %s3, 32
  %v1068 = vld [vmem:[%s1067] sm:$0xff]
  %v1069 = vld [vmem:[%s1067 + $0x8] sm:$0xff]
  %v1070 = vld [vmem:[%s1067 + $0x10] sm:$0xff]
  %v1071 = vld [vmem:[%s1067 + $0x18] sm:$0xff]
  %s1072 = scalar_lea.vmem %s4, 8
  %v1073 = vld [vmem:[%s1072] sm:$0x1f]
  %s1074 = scalar_lea.vmem %s5, 16
  %v1075 = vld [vmem:[%s1074] sm:$0xff]
  %v1076 = vld [vmem:[%s1074 + $0x8] sm:$0xff]
  %s1077 = scalar_lea.vmem %s6, 1
  %v1078 = vld [vmem:[%s1077] sm:$0x1]
  %v1080 = vsel %vm441, %v1063, 0
  %v1083 = vsel %vm441, %v1064, 0
  %v1086 = vsel %vm441, %v1065, 0
  %v1089 = vsel %vm441, %v1066, 0
  %1091 = vmatprep.subr.mxu0 0.0
  %1092 = vmatpush1.msra.mxu0 %v1068
  %1093 = vmatprep.subr.mxu0 0.0
  %1094 = vmatpush1.msra.mxu0 %v1069
  %1095 = vmatprep.subr.mxu0 0.0
  %1096 = vmatpush1.msra.mxu0 %v1070
  %1097 = vmatprep.subr.mxu0 0.0
  %1098 = vmatpush1.msra.mxu0 %v1071
  %1099 = vmatprep.subr.mxu0 0.0
  %1100 = vmatpush1.msra.mxu0 0.0
  %1101 = vmatprep.subr.mxu0 0.0
  %1102 = vmatpush1.msra.mxu0 0.0
  %1103 = vmatprep.subr.mxu0 0.0
  %1104 = vmatpush1.msra.mxu0 0.0
  %1105 = vmatprep.subr.mxu0 0.0
  %1106 = vmatpush1.msra.mxu0 0.0
  %1107 = vmatprep.subr.mxu0 0.0
  %1108 = vmatpush1.msra.mxu0 0.0
  %1109 = vmatprep.subr.mxu0 0.0
  %1110 = vmatpush1.msra.mxu0 0.0
  %1111 = vmatprep.subr.mxu0 0.0
  %1112 = vmatpush1.msra.mxu0 0.0
  %1113 = vmatprep.subr.mxu0 0.0
  %1114 = vmatpush1.msra.mxu0 0.0
  %1115 = vmatprep.subr.mxu0 0.0
  %1116 = vmatpush1.msra.mxu0 0.0
  %1117 = vmatprep.subr.mxu0 0.0
  %1118 = vmatpush1.msra.mxu0 0.0
  %1119 = vmatprep.subr.mxu0 0.0
  %1120 = vmatpush1.msra.mxu0 0.0
  %1121 = vmatprep.subr.mxu0 0.0
  %1122 = vmatpush1.msra.mxu0 0.0
  %1123 = vmatprep.subr.mxu0 0.0
  %1124 = vmatpush1.msra.mxu0 0.0
  %1125 = vmatprep.subr.mxu0 0.0
  %1126 = vmatpush1.msra.mxu0 0.0
  %1127 = vmatprep.subr.mxu0 0.0
  %1128 = vmatpush1.msra.mxu0 0.0
  %1129 = vmatprep.subr.mxu0 0.0
  %1130 = vmatpush1.msra.mxu0 0.0
  %1131 = vmatprep.subr.mxu0 0.0
  %1132 = vmatpush1.msra.mxu0 0.0
  %1133 = vmatprep.subr.mxu0 0.0
  %1134 = vmatpush1.msra.mxu0 0.0
  %1135 = vmatprep.subr.mxu0 0.0
  %1136 = vmatpush1.msra.mxu0 0.0
  %1137 = vmatprep.subr.mxu0 0.0
  %1138 = vmatpush1.msra.mxu0 0.0
  %1139 = vmatprep.subr.mxu0 0.0
  %1140 = vmatpush1.msra.mxu0 0.0
  %1141 = vmatprep.subr.mxu0 0.0
  %1142 = vmatpush1.msra.mxu0 0.0
  %1143 = vmatprep.subr.mxu0 0.0
  %1144 = vmatpush1.msra.mxu0 0.0
  %1145 = vmatprep.subr.mxu0 0.0
  %1146 = vmatpush1.msra.mxu0 0.0
  %1147 = vmatprep.subr.mxu0 0.0
  %1148 = vmatpush1.msra.mxu0 0.0
  %1149 = vmatprep.subr.mxu0 0.0
  %1150 = vmatpush1.msra.mxu0 0.0
  %1151 = vmatprep.subr.mxu0 0.0
  %1152 = vmatpush1.msra.mxu0 0.0
  %1153 = vmatprep.subr.mxu0 0.0
  %1154 = vmatpush1.msra.mxu0 0.0
  %1155 = vmatprep.mubr.f32.mxu0 0.0
  %1156 = vmatmul.mubr.f32.gmra.mrb[0].mxu0 %v1080
  %v1157 = vpop.f32.mrb[0].mxu0
  %v1158 = vadd.f32 0.0, %v1157
  %v1159 = vpop.f32.mrb[0].mxu0
  %1160 = vmatprep.mubr.f32.mxu0 0.0
  %1161 = vmatmul.mubr.f32.gmra.mrb[0].mxu0 %v1083
  %v1162 = vpop.f32.mrb[0].mxu0
  %v1163 = vadd.f32 0.0, %v1162
  %v1164 = vpop.f32.mrb[0].mxu0
  %1165 = vmatprep.mubr.f32.mxu0 0.0
  %1166 = vmatmul.mubr.f32.gmra.mrb[0].mxu0 %v1086
  %v1167 = vpop.f32.mrb[0].mxu0
  %v1168 = vadd.f32 0.0, %v1167
  %v1169 = vpop.f32.mrb[0].mxu0
  %1170 = vmatprep.mubr.f32.mxu0 0.0
  %1171 = vmatmul.mubr.f32.gmra.mrb[0].mxu0 %v1089
  %v1172 = vpop.f32.mrb[0].mxu0
  %v1173 = vadd.f32 0.0, %v1172
  %v1174 = vpop.f32.mrb[0].mxu0
  %1175 = vdwg.mxu0
  %v1176 = vlaneseq
  %v1177 = vshrl.u32 %v1176, 7
  %v1178 = vsub.s32 3, %v1177
  %v1179 = vrot.slane %v1073, %v1178
  %v1180 = vmul.f32 %v1158, %v1179
  %v1181 = vmul.f32 %v1163, %v1179
  %v1182 = vmul.f32 %v1168, %v1179
  %v1183 = vmul.f32 %v1173, %v1179
  %v1184 = vrot.slane %v1158, 5
  %v1185 = vrot.slane %v1163, 5
  %v1186 = vrot.slane %v1168, 5
  %v1187 = vrot.slane %v1173, 5
  %v1188 = vsel %vm631, %v1186, %v1187
  %v1189 = vsel %vm631, %v1185, %v1186
  %v1190 = vsel %vm631, %v1184, %v1185
  %v1191 = vsel %vm631, %v1187, %v1184
  %v1192 = vsel %vm385, %v1191, 0.0
  %v1193 = vsel %vm386, %v1190, 0.0
  %v1194 = vsel %vm387, %v1189, 0.0
  %v1195 = vsel %vm388, %v1188, 0.0
  %v1196 = vlaneseq
  %v1197 = vshrl.u32 %v1196, 7
  %v1198 = vsub.s32 0, %v1197
  %v1199 = vrot.slane %v1073, %v1198
  %v1200 = vmul.f32 %v1192, %v1199
  %v1201 = vmul.f32 %v1193, %v1199
  %v1202 = vmul.f32 %v1194, %v1199
  %v1203 = vmul.f32 %v1195, %v1199
  %v1204 = vadd.f32 %v1180, %v1200
  %v1205 = vadd.f32 %v1181, %v1201
  %v1206 = vadd.f32 %v1182, %v1202
  %v1207 = vadd.f32 %v1183, %v1203
  %v1208 = vrot.slane %v1158, 6
  %v1209 = vrot.slane %v1163, 6
  %v1210 = vrot.slane %v1168, 6
  %v1211 = vrot.slane %v1173, 6
  %v1212 = vsel %vm696, %v1210, %v1211
  %v1213 = vsel %vm696, %v1209, %v1210
  %v1214 = vsel %vm696, %v1208, %v1209
  %v1215 = vsel %vm696, %v1211, %v1208
  %v1216 = vsel %vm397, %v1215, 0.0
  %v1217 = vsel %vm398, %v1214, 0.0
  %v1218 = vsel %vm399, %v1213, 0.0
  %v1219 = vsel %vm400, %v1212, 0.0
  %v1220 = vlaneseq
  %v1221 = vshrl.u32 %v1220, 7
  %v1222 = vsub.s32 1, %v1221
  %v1223 = vrot.slane %v1073, %v1222
  %v1224 = vmul.f32 %v1216, %v1223
  %v1225 = vmul.f32 %v1217, %v1223
  %v1226 = vmul.f32 %v1218, %v1223
  %v1227 = vmul.f32 %v1219, %v1223
  %v1228 = vadd.f32 %v1204, %v1224
  %v1229 = vadd.f32 %v1205, %v1225
  %v1230 = vadd.f32 %v1206, %v1226
  %v1231 = vadd.f32 %v1207, %v1227
  %v1232 = vrot.slane %v1158, 7
  %v1233 = vrot.slane %v1163, 7
  %v1234 = vrot.slane %v1168, 7
  %v1235 = vrot.slane %v1173, 7
  %v1236 = vsel %vm761, %v1234, %v1235
  %v1237 = vsel %vm761, %v1233, %v1234
  %v1238 = vsel %vm761, %v1232, %v1233
  %v1239 = vsel %vm761, %v1235, %v1232
  %v1240 = vsel %vm409, %v1239, 0.0
  %v1241 = vsel %vm410, %v1238, 0.0
  %v1242 = vsel %vm411, %v1237, 0.0
  %v1243 = vsel %vm412, %v1236, 0.0
  %v1244 = vlaneseq
  %v1245 = vshrl.u32 %v1244, 7
  %v1246 = vsub.s32 2, %v1245
  %v1247 = vrot.slane %v1073, %v1246
  %v1248 = vmul.f32 %v1240, %v1247
  %v1249 = vmul.f32 %v1241, %v1247
  %v1250 = vmul.f32 %v1242, %v1247
  %v1251 = vmul.f32 %v1243, %v1247
  %v1252 = vadd.f32 %v1228, %v1248
  %v1253 = vadd.f32 %v1229, %v1249
  %v1254 = vadd.f32 %v1230, %v1250
  %v1255 = vadd.f32 %v1231, %v1251
  %v1256 = vrot.slane %v1158, 1
  %v1257 = vrot.slane %v1163, 1
  %v1258 = vrot.slane %v1168, 1
  %v1259 = vrot.slane %v1173, 1
  %v1260 = vsel %vm826, %v1258, %v1259
  %v1261 = vsel %vm826, %v1257, %v1258
  %v1262 = vsel %vm826, %v1256, %v1257
  %v1263 = vsel %vm826, %v1259, %v1256
  %v1264 = vsel %vm421, %v1262, 0.0
  %v1265 = vsel %vm422, %v1261, 0.0
  %v1266 = vsel %vm423, %v1260, 0.0
  %v1267 = vsel %vm424, %v1263, 0.0
  %v1268 = vlaneseq
  %v1269 = vshrl.u32 %v1268, 7
  %v1270 = vsub.s32 4, %v1269
  %v1271 = vrot.slane %v1073, %v1270
  %v1272 = vmul.f32 %v1264, %v1271
  %v1273 = vmul.f32 %v1265, %v1271
  %v1274 = vmul.f32 %v1266, %v1271
  %v1275 = vmul.f32 %v1267, %v1271
  %v1276 = vadd.f32 %v1252, %v1272
  %v1277 = vadd.f32 %v1253, %v1273
  %v1278 = vadd.f32 %v1254, %v1274
  %v1279 = vadd.f32 %v1255, %v1275
  %v1281 = vlaneseq
  %v1282 = vshrl.u32 %v1281, 7
  %v1283 = vsub.s32 0, %v1282
  %v1284 = vrot.slane %v1078, %v1283
  %v1287 = vsel %vm885, %v1276, 0
  %v1290 = vsel %vm885, %v1277, 0
  %v1293 = vsel %vm885, %v1278, 0
  %v1296 = vsel %vm885, %v1279, 0
  %1298 = vmatprep.subr.mxu0 0.0
  %1299 = vmatpush1.msra.mxu0 %v1075
  %1300 = vmatprep.subr.mxu0 0.0
  %1301 = vmatpush1.msra.mxu0 %v1076
  %1302 = vmatprep.subr.mxu0 0.0
  %1303 = vmatpush1.msra.mxu0 0.0
  %1304 = vmatprep.subr.mxu0 0.0
  %1305 = vmatpush1.msra.mxu0 0.0
  %1306 = vmatprep.subr.mxu0 0.0
  %1307 = vmatpush1.msra.mxu0 0.0
  %1308 = vmatprep.subr.mxu0 0.0
  %1309 = vmatpush1.msra.mxu0 0.0
  %1310 = vmatprep.subr.mxu0 0.0
  %1311 = vmatpush1.msra.mxu0 0.0
  %1312 = vmatprep.subr.mxu0 0.0
  %1313 = vmatpush1.msra.mxu0 0.0
  %1314 = vmatprep.subr.mxu0 0.0
  %1315 = vmatpush1.msra.mxu0 0.0
  %1316 = vmatprep.subr.mxu0 0.0
  %1317 = vmatpush1.msra.mxu0 0.0
  %1318 = vmatprep.subr.mxu0 0.0
  %1319 = vmatpush1.msra.mxu0 0.0
  %1320 = vmatprep.subr.mxu0 0.0
  %1321 = vmatpush1.msra.mxu0 0.0
  %1322 = vmatprep.subr.mxu0 0.0
  %1323 = vmatpush1.msra.mxu0 0.0
  %1324 = vmatprep.subr.mxu0 0.0
  %1325 = vmatpush1.msra.mxu0 0.0
  %1326 = vmatprep.subr.mxu0 0.0
  %1327 = vmatpush1.msra.mxu0 0.0
  %1328 = vmatprep.subr.mxu0 0.0
  %1329 = vmatpush1.msra.mxu0 0.0
  %1330 = vmatprep.subr.mxu0 0.0
  %1331 = vmatpush1.msra.mxu0 0.0
  %1332 = vmatprep.subr.mxu0 0.0
  %1333 = vmatpush1.msra.mxu0 0.0
  %1334 = vmatprep.subr.mxu0 0.0
  %1335 = vmatpush1.msra.mxu0 0.0
  %1336 = vmatprep.subr.mxu0 0.0
  %1337 = vmatpush1.msra.mxu0 0.0
  %1338 = vmatprep.subr.mxu0 0.0
  %1339 = vmatpush1.msra.mxu0 0.0
  %1340 = vmatprep.subr.mxu0 0.0
  %1341 = vmatpush1.msra.mxu0 0.0
  %1342 = vmatprep.subr.mxu0 0.0
  %1343 = vmatpush1.msra.mxu0 0.0
  %1344 = vmatprep.subr.mxu0 0.0
  %1345 = vmatpush1.msra.mxu0 0.0
  %1346 = vmatprep.subr.mxu0 0.0
  %1347 = vmatpush1.msra.mxu0 0.0
  %1348 = vmatprep.subr.mxu0 0.0
  %1349 = vmatpush1.msra.mxu0 0.0
  %1350 = vmatprep.subr.mxu0 0.0
  %1351 = vmatpush1.msra.mxu0 0.0
  %1352 = vmatprep.subr.mxu0 0.0
  %1353 = vmatpush1.msra.mxu0 0.0
  %1354 = vmatprep.subr.mxu0 0.0
  %1355 = vmatpush1.msra.mxu0 0.0
  %1356 = vmatprep.subr.mxu0 0.0
  %1357 = vmatpush1.msra.mxu0 0.0
  %1358 = vmatprep.subr.mxu0 0.0
  %1359 = vmatpush1.msra.mxu0 0.0
  %1360 = vmatprep.subr.mxu0 0.0
  %1361 = vmatpush1.msra.mxu0 0.0
  %1362 = vmatprep.mubr.f32.mxu0 0.0
  %1363 = vmatmul.mubr.f32.gmra.mrb[0].mxu0 %v1287
  %v1364 = vpop.f32.mrb[0].mxu0
  %v1365 = vadd.f32 %v1284, %v1364
  %v1366 = vpop.f32.mrb[0].mxu0
  %1367 = vmatprep.mubr.f32.mxu0 0.0
  %1368 = vmatmul.mubr.f32.gmra.mrb[0].mxu0 %v1290
  %v1369 = vpop.f32.mrb[0].mxu0
  %v1370 = vadd.f32 %v1284, %v1369
  %v1371 = vpop.f32.mrb[0].mxu0
  %1372 = vmatprep.mubr.f32.mxu0 0.0
  %1373 = vmatmul.mubr.f32.gmra.mrb[0].mxu0 %v1293
  %v1374 = vpop.f32.mrb[0].mxu0
  %v1375 = vadd.f32 %v1284, %v1374
  %v1376 = vpop.f32.mrb[0].mxu0
  %1377 = vmatprep.mubr.f32.mxu0 0.0
  %1378 = vmatmul.mubr.f32.gmra.mrb[0].mxu0 %v1296
  %v1379 = vpop.f32.mrb[0].mxu0
  %v1380 = vadd.f32 %v1284, %v1379
  %v1381 = vpop.f32.mrb[0].mxu0
  %1382 = vdwg.mxu0
  %v1383 = vmax.f32 %v1365, 0.0
  %v1384 = vmax.f32 %v1370, 0.0
  %v1385 = vmax.f32 %v1375, 0.0
  %v1386 = vmax.f32 %v1380, 0.0
  %s1387 = scalar_lea.vmem %s3, 64
  %v1388 = vld [vmem:[%s1387] sm:$0xff]
  %v1389 = vld [vmem:[%s1387 + $0x8] sm:$0xff]
  %v1390 = vld [vmem:[%s1387 + $0x10] sm:$0xff]
  %v1391 = vld [vmem:[%s1387 + $0x18] sm:$0xff]
  %s1392 = scalar_lea.vmem %s4, 16
  %v1393 = vld [vmem:[%s1392] sm:$0x1f]
  %s1394 = scalar_lea.vmem %s5, 32
  %v1395 = vld [vmem:[%s1394] sm:$0xff]
  %v1396 = vld [vmem:[%s1394 + $0x8] sm:$0xff]
  %s1397 = scalar_lea.vmem %s6, 2
  %v1398 = vld [vmem:[%s1397] sm:$0x1]
  %v1400 = vsel %vm441, %v1383, 0
  %v1403 = vsel %vm441, %v1384, 0
  %v1406 = vsel %vm441, %v1385, 0
  %v1409 = vsel %vm441, %v1386, 0
  %1411 = vmatprep.subr.mxu0 0.0
  %1412 = vmatpush1.msra.mxu0 %v1388
  %1413 = vmatprep.subr.mxu0 0.0
  %1414 = vmatpush1.msra.mxu0 %v1389
  %1415 = vmatprep.subr.mxu0 0.0
  %1416 = vmatpush1.msra.mxu0 %v1390
  %1417 = vmatprep.subr.mxu0 0.0
  %1418 = vmatpush1.msra.mxu0 %v1391
  %1419 = vmatprep.subr.mxu0 0.0
  %1420 = vmatpush1.msra.mxu0 0.0
  %1421 = vmatprep.subr.mxu0 0.0
  %1422 = vmatpush1.msra.mxu0 0.0
  %1423 = vmatprep.subr.mxu0 0.0
  %1424 = vmatpush1.msra.mxu0 0.0
  %1425 = vmatprep.subr.mxu0 0.0
  %1426 = vmatpush1.msra.mxu0 0.0
  %1427 = vmatprep.subr.mxu0 0.0
  %1428 = vmatpush1.msra.mxu0 0.0
  %1429 = vmatprep.subr.mxu0 0.0
  %1430 = vmatpush1.msra.mxu0 0.0
  %1431 = vmatprep.subr.mxu0 0.0
  %1432 = vmatpush1.msra.mxu0 0.0
  %1433 = vmatprep.subr.mxu0 0.0
  %1434 = vmatpush1.msra.mxu0 0.0
  %1435 = vmatprep.subr.mxu0 0.0
  %1436 = vmatpush1.msra.mxu0 0.0
  %1437 = vmatprep.subr.mxu0 0.0
  %1438 = vmatpush1.msra.mxu0 0.0
  %1439 = vmatprep.subr.mxu0 0.0
  %1440 = vmatpush1.msra.mxu0 0.0
  %1441 = vmatprep.subr.mxu0 0.0
  %1442 = vmatpush1.msra.mxu0 0.0
  %1443 = vmatprep.subr.mxu0 0.0
  %1444 = vmatpush1.msra.mxu0 0.0
  %1445 = vmatprep.subr.mxu0 0.0
  %1446 = vmatpush1.msra.mxu0 0.0
  %1447 = vmatprep.subr.mxu0 0.0
  %1448 = vmatpush1.msra.mxu0 0.0
  %1449 = vmatprep.subr.mxu0 0.0
  %1450 = vmatpush1.msra.mxu0 0.0
  %1451 = vmatprep.subr.mxu0 0.0
  %1452 = vmatpush1.msra.mxu0 0.0
  %1453 = vmatprep.subr.mxu0 0.0
  %1454 = vmatpush1.msra.mxu0 0.0
  %1455 = vmatprep.subr.mxu0 0.0
  %1456 = vmatpush1.msra.mxu0 0.0
  %1457 = vmatprep.subr.mxu0 0.0
  %1458 = vmatpush1.msra.mxu0 0.0
  %1459 = vmatprep.subr.mxu0 0.0
  %1460 = vmatpush1.msra.mxu0 0.0
  %1461 = vmatprep.subr.mxu0 0.0
  %1462 = vmatpush1.msra.mxu0 0.0
  %1463 = vmatprep.subr.mxu0 0.0
  %1464 = vmatpush1.msra.mxu0 0.0
  %1465 = vmatprep.subr.mxu0 0.0
  %1466 = vmatpush1.msra.mxu0 0.0
  %1467 = vmatprep.subr.mxu0 0.0
  %1468 = vmatpush1.msra.mxu0 0.0
  %1469 = vmatprep.subr.mxu0 0.0
  %1470 = vmatpush1.msra.mxu0 0.0
  %1471 = vmatprep.subr.mxu0 0.0
  %1472 = vmatpush1.msra.mxu0 0.0
  %1473 = vmatprep.subr.mxu0 0.0
  %1474 = vmatpush1.msra.mxu0 0.0
  %1475 = vmatprep.mubr.f32.mxu0 0.0
  %1476 = vmatmul.mubr.f32.gmra.mrb[0].mxu0 %v1400
  %v1477 = vpop.f32.mrb[0].mxu0
  %v1478 = vadd.f32 0.0, %v1477
  %v1479 = vpop.f32.mrb[0].mxu0
  %1480 = vmatprep.mubr.f32.mxu0 0.0
  %1481 = vmatmul.mubr.f32.gmra.mrb[0].mxu0 %v1403
  %v1482 = vpop.f32.mrb[0].mxu0
  %v1483 = vadd.f32 0.0, %v1482
  %v1484 = vpop.f32.mrb[0].mxu0
  %1485 = vmatprep.mubr.f32.mxu0 0.0
  %1486 = vmatmul.mubr.f32.gmra.mrb[0].mxu0 %v1406
  %v1487 = vpop.f32.mrb[0].mxu0
  %v1488 = vadd.f32 0.0, %v1487
  %v1489 = vpop.f32.mrb[0].mxu0
  %1490 = vmatprep.mubr.f32.mxu0 0.0
  %1491 = vmatmul.mubr.f32.gmra.mrb[0].mxu0 %v1409
  %v1492 = vpop.f32.mrb[0].mxu0
  %v1493 = vadd.f32 0.0, %v1492
  %v1494 = vpop.f32.mrb[0].mxu0
  %1495 = vdwg.mxu0
  %v1496 = vlaneseq
  %v1497 = vshrl.u32 %v1496, 7
  %v1498 = vsub.s32 3, %v1497
  %v1499 = vrot.slane %v1393, %v1498
  %v1500 = vmul.f32 %v1478, %v1499
  %v1501 = vmul.f32 %v1483, %v1499
  %v1502 = vmul.f32 %v1488, %v1499
  %v1503 = vmul.f32 %v1493, %v1499
  %v1504 = vrot.slane %v1478, 5
  %v1505 = vrot.slane %v1483, 5
  %v1506 = vrot.slane %v1488, 5
  %v1507 = vrot.slane %v1493, 5
  %v1508 = vsel %vm631, %v1506, %v1507
  %v1509 = vsel %vm631, %v1505, %v1506
  %v1510 = vsel %vm631, %v1504, %v1505
  %v1511 = vsel %vm631, %v1507, %v1504
  %v1512 = vsel %vm385, %v1511, 0.0
  %v1513 = vsel %vm386, %v1510, 0.0
  %v1514 = vsel %vm387, %v1509, 0.0
  %v1515 = vsel %vm388, %v1508, 0.0
  %v1516 = vlaneseq
  %v1517 = vshrl.u32 %v1516, 7
  %v1518 = vsub.s32 0, %v1517
  %v1519 = vrot.slane %v1393, %v1518
  %v1520 = vmul.f32 %v1512, %v1519
  %v1521 = vmul.f32 %v1513, %v1519
  %v1522 = vmul.f32 %v1514, %v1519
  %v1523 = vmul.f32 %v1515, %v1519
  %v1524 = vadd.f32 %v1500, %v1520
  %v1525 = vadd.f32 %v1501, %v1521
  %v1526 = vadd.f32 %v1502, %v1522
  %v1527 = vadd.f32 %v1503, %v1523
  %v1528 = vrot.slane %v1478, 6
  %v1529 = vrot.slane %v1483, 6
  %v1530 = vrot.slane %v1488, 6
  %v1531 = vrot.slane %v1493, 6
  %v1532 = vsel %vm696, %v1530, %v1531
  %v1533 = vsel %vm696, %v1529, %v1530
  %v1534 = vsel %vm696, %v1528, %v1529
  %v1535 = vsel %vm696, %v1531, %v1528
  %v1536 = vsel %vm397, %v1535, 0.0
  %v1537 = vsel %vm398, %v1534, 0.0
  %v1538 = vsel %vm399, %v1533, 0.0
  %v1539 = vsel %vm400, %v1532, 0.0
  %v1540 = vlaneseq
  %v1541 = vshrl.u32 %v1540, 7
  %v1542 = vsub.s32 1, %v1541
  %v1543 = vrot.slane %v1393, %v1542
  %v1544 = vmul.f32 %v1536, %v1543
  %v1545 = vmul.f32 %v1537, %v1543
  %v1546 = vmul.f32 %v1538, %v1543
  %v1547 = vmul.f32 %v1539, %v1543
  %v1548 = vadd.f32 %v1524, %v1544
  %v1549 = vadd.f32 %v1525, %v1545
  %v1550 = vadd.f32 %v1526, %v1546
  %v1551 = vadd.f32 %v1527, %v1547
  %v1552 = vrot.slane %v1478, 7
  %v1553 = vrot.slane %v1483, 7
  %v1554 = vrot.slane %v1488, 7
  %v1555 = vrot.slane %v1493, 7
  %v1556 = vsel %vm761, %v1554, %v1555
  %v1557 = vsel %vm761, %v1553, %v1554
  %v1558 = vsel %vm761, %v1552, %v1553
  %v1559 = vsel %vm761, %v1555, %v1552
  %v1560 = vsel %vm409, %v1559, 0.0
  %v1561 = vsel %vm410, %v1558, 0.0
  %v1562 = vsel %vm411, %v1557, 0.0
  %v1563 = vsel %vm412, %v1556, 0.0
  %v1564 = vlaneseq
  %v1565 = vshrl.u32 %v1564, 7
  %v1566 = vsub.s32 2, %v1565
  %v1567 = vrot.slane %v1393, %v1566
  %v1568 = vmul.f32 %v1560, %v1567
  %v1569 = vmul.f32 %v1561, %v1567
  %v1570 = vmul.f32 %v1562, %v1567
  %v1571 = vmul.f32 %v1563, %v1567
  %v1572 = vadd.f32 %v1548, %v1568
  %v1573 = vadd.f32 %v1549, %v1569
  %v1574 = vadd.f32 %v1550, %v1570
  %v1575 = vadd.f32 %v1551, %v1571
  %v1576 = vrot.slane %v1478, 1
  %v1577 = vrot.slane %v1483, 1
  %v1578 = vrot.slane %v1488, 1
  %v1579 = vrot.slane %v1493, 1
  %v1580 = vsel %vm826, %v1578, %v1579
  %v1581 = vsel %vm826, %v1577, %v1578
  %v1582 = vsel %vm826, %v1576, %v1577
  %v1583 = vsel %vm826, %v1579, %v1576
  %v1584 = vsel %vm421, %v1582, 0.0
  %v1585 = vsel %vm422, %v1581, 0.0
  %v1586 = vsel %vm423, %v1580, 0.0
  %v1587 = vsel %vm424, %v1583, 0.0
  %v1588 = vlaneseq
  %v1589 = vshrl.u32 %v1588, 7
  %v1590 = vsub.s32 4, %v1589
  %v1591 = vrot.slane %v1393, %v1590
  %v1592 = vmul.f32 %v1584, %v1591
  %v1593 = vmul.f32 %v1585, %v1591
  %v1594 = vmul.f32 %v1586, %v1591
  %v1595 = vmul.f32 %v1587, %v1591
  %v1596 = vadd.f32 %v1572, %v1592
  %v1597 = vadd.f32 %v1573, %v1593
  %v1598 = vadd.f32 %v1574, %v1594
  %v1599 = vadd.f32 %v1575, %v1595
  %v1601 = vlaneseq
  %v1602 = vshrl.u32 %v1601, 7
  %v1603 = vsub.s32 0, %v1602
  %v1604 = vrot.slane %v1398, %v1603
  %v1607 = vsel %vm885, %v1596, 0
  %v1610 = vsel %vm885, %v1597, 0
  %v1613 = vsel %vm885, %v1598, 0
  %v1616 = vsel %vm885, %v1599, 0
  %1618 = vmatprep.subr.mxu0 0.0
  %1619 = vmatpush1.msra.mxu0 %v1395
  %1620 = vmatprep.subr.mxu0 0.0
  %1621 = vmatpush1.msra.mxu0 %v1396
  %1622 = vmatprep.subr.mxu0 0.0
  %1623 = vmatpush1.msra.mxu0 0.0
  %1624 = vmatprep.subr.mxu0 0.0
  %1625 = vmatpush1.msra.mxu0 0.0
  %1626 = vmatprep.subr.mxu0 0.0
  %1627 = vmatpush1.msra.mxu0 0.0
  %1628 = vmatprep.subr.mxu0 0.0
  %1629 = vmatpush1.msra.mxu0 0.0
  %1630 = vmatprep.subr.mxu0 0.0
  %1631 = vmatpush1.msra.mxu0 0.0
  %1632 = vmatprep.subr.mxu0 0.0
  %1633 = vmatpush1.msra.mxu0 0.0
  %1634 = vmatprep.subr.mxu0 0.0
  %1635 = vmatpush1.msra.mxu0 0.0
  %1636 = vmatprep.subr.mxu0 0.0
  %1637 = vmatpush1.msra.mxu0 0.0
  %1638 = vmatprep.subr.mxu0 0.0
  %1639 = vmatpush1.msra.mxu0 0.0
  %1640 = vmatprep.subr.mxu0 0.0
  %1641 = vmatpush1.msra.mxu0 0.0
  %1642 = vmatprep.subr.mxu0 0.0
  %1643 = vmatpush1.msra.mxu0 0.0
  %1644 = vmatprep.subr.mxu0 0.0
  %1645 = vmatpush1.msra.mxu0 0.0
  %1646 = vmatprep.subr.mxu0 0.0
  %1647 = vmatpush1.msra.mxu0 0.0
  %1648 = vmatprep.subr.mxu0 0.0
  %1649 = vmatpush1.msra.mxu0 0.0
  %1650 = vmatprep.subr.mxu0 0.0
  %1651 = vmatpush1.msra.mxu0 0.0
  %1652 = vmatprep.subr.mxu0 0.0
  %1653 = vmatpush1.msra.mxu0 0.0
  %1654 = vmatprep.subr.mxu0 0.0
  %1655 = vmatpush1.msra.mxu0 0.0
  %1656 = vmatprep.subr.mxu0 0.0
  %1657 = vmatpush1.msra.mxu0 0.0
  %1658 = vmatprep.subr.mxu0 0.0
  %1659 = vmatpush1.msra.mxu0 0.0
  %1660 = vmatprep.subr.mxu0 0.0
  %1661 = vmatpush1.msra.mxu0 0.0
  %1662 = vmatprep.subr.mxu0 0.0
  %1663 = vmatpush1.msra.mxu0 0.0
  %1664 = vmatprep.subr.mxu0 0.0
  %1665 = vmatpush1.msra.mxu0 0.0
  %1666 = vmatprep.subr.mxu0 0.0
  %1667 = vmatpush1.msra.mxu0 0.0
  %1668 = vmatprep.subr.mxu0 0.0
  %1669 = vmatpush1.msra.mxu0 0.0
  %1670 = vmatprep.subr.mxu0 0.0
  %1671 = vmatpush1.msra.mxu0 0.0
  %1672 = vmatprep.subr.mxu0 0.0
  %1673 = vmatpush1.msra.mxu0 0.0
  %1674 = vmatprep.subr.mxu0 0.0
  %1675 = vmatpush1.msra.mxu0 0.0
  %1676 = vmatprep.subr.mxu0 0.0
  %1677 = vmatpush1.msra.mxu0 0.0
  %1678 = vmatprep.subr.mxu0 0.0
  %1679 = vmatpush1.msra.mxu0 0.0
  %1680 = vmatprep.subr.mxu0 0.0
  %1681 = vmatpush1.msra.mxu0 0.0
  %1682 = vmatprep.mubr.f32.mxu0 0.0
  %1683 = vmatmul.mubr.f32.gmra.mrb[0].mxu0 %v1607
  %v1684 = vpop.f32.mrb[0].mxu0
  %v1685 = vadd.f32 %v1604, %v1684
  %v1686 = vpop.f32.mrb[0].mxu0
  %1687 = vmatprep.mubr.f32.mxu0 0.0
  %1688 = vmatmul.mubr.f32.gmra.mrb[0].mxu0 %v1610
  %v1689 = vpop.f32.mrb[0].mxu0
  %v1690 = vadd.f32 %v1604, %v1689
  %v1691 = vpop.f32.mrb[0].mxu0
  %1692 = vmatprep.mubr.f32.mxu0 0.0
  %1693 = vmatmul.mubr.f32.gmra.mrb[0].mxu0 %v1613
  %v1694 = vpop.f32.mrb[0].mxu0
  %v1695 = vadd.f32 %v1604, %v1694
  %v1696 = vpop.f32.mrb[0].mxu0
  %1697 = vmatprep.mubr.f32.mxu0 0.0
  %1698 = vmatmul.mubr.f32.gmra.mrb[0].mxu0 %v1616
  %v1699 = vpop.f32.mrb[0].mxu0
  %v1700 = vadd.f32 %v1604, %v1699
  %v1701 = vpop.f32.mrb[0].mxu0
  %1702 = vdwg.mxu0
  %v1703 = vmax.f32 %v1685, 0.0
  %v1704 = vmax.f32 %v1690, 0.0
  %v1705 = vmax.f32 %v1695, 0.0
  %v1706 = vmax.f32 %v1700, 0.0
  %v1707 = vld [vmem:[%s7] sm:$0xff]
  %v1708 = vld [vmem:[%s7 + $0x8] sm:$0xff]
  %v1709 = vld [vmem:[%s7 + $0x10] sm:$0xff]
  %v1710 = vld [vmem:[%s7 + $0x18] sm:$0xff]
  %v1711 = vld [vmem:[%s8] sm:$0x1]
  %v1713 = vlaneseq
  %v1714 = vshrl.u32 %v1713, 7
  %v1715 = vsub.s32 0, %v1714
  %v1716 = vrot.slane %v1711, %v1715
  %v1719 = vsel %vm441, %v1703, 0
  %v1722 = vsel %vm441, %v1704, 0
  %v1725 = vsel %vm441, %v1705, 0
  %v1728 = vsel %vm441, %v1706, 0
  %1730 = vmatprep.subr.mxu0 0.0
  %1731 = vmatpush1.msra.mxu0 %v1707
  %1732 = vmatprep.subr.mxu0 0.0
  %1733 = vmatpush1.msra.mxu0 %v1708
  %1734 = vmatprep.subr.mxu0 0.0
  %1735 = vmatpush1.msra.mxu0 %v1709
  %1736 = vmatprep.subr.mxu0 0.0
  %1737 = vmatpush1.msra.mxu0 %v1710
  %1738 = vmatprep.subr.mxu0 0.0
  %1739 = vmatpush1.msra.mxu0 0.0
  %1740 = vmatprep.subr.mxu0 0.0
  %1741 = vmatpush1.msra.mxu0 0.0
  %1742 = vmatprep.subr.mxu0 0.0
  %1743 = vmatpush1.msra.mxu0 0.0
  %1744 = vmatprep.subr.mxu0 0.0
  %1745 = vmatpush1.msra.mxu0 0.0
  %1746 = vmatprep.subr.mxu0 0.0
  %1747 = vmatpush1.msra.mxu0 0.0
  %1748 = vmatprep.subr.mxu0 0.0
  %1749 = vmatpush1.msra.mxu0 0.0
  %1750 = vmatprep.subr.mxu0 0.0
  %1751 = vmatpush1.msra.mxu0 0.0
  %1752 = vmatprep.subr.mxu0 0.0
  %1753 = vmatpush1.msra.mxu0 0.0
  %1754 = vmatprep.subr.mxu0 0.0
  %1755 = vmatpush1.msra.mxu0 0.0
  %1756 = vmatprep.subr.mxu0 0.0
  %1757 = vmatpush1.msra.mxu0 0.0
  %1758 = vmatprep.subr.mxu0 0.0
  %1759 = vmatpush1.msra.mxu0 0.0
  %1760 = vmatprep.subr.mxu0 0.0
  %1761 = vmatpush1.msra.mxu0 0.0
  %1762 = vmatprep.subr.mxu0 0.0
  %1763 = vmatpush1.msra.mxu0 0.0
  %1764 = vmatprep.subr.mxu0 0.0
  %1765 = vmatpush1.msra.mxu0 0.0
  %1766 = vmatprep.subr.mxu0 0.0
  %1767 = vmatpush1.msra.mxu0 0.0
  %1768 = vmatprep.subr.mxu0 0.0
  %1769 = vmatpush1.msra.mxu0 0.0
  %1770 = vmatprep.subr.mxu0 0.0
  %1771 = vmatpush1.msra.mxu0 0.0
  %1772 = vmatprep.subr.mxu0 0.0
  %1773 = vmatpush1.msra.mxu0 0.0
  %1774 = vmatprep.subr.mxu0 0.0
  %1775 = vmatpush1.msra.mxu0 0.0
  %1776 = vmatprep.subr.mxu0 0.0
  %1777 = vmatpush1.msra.mxu0 0.0
  %1778 = vmatprep.subr.mxu0 0.0
  %1779 = vmatpush1.msra.mxu0 0.0
  %1780 = vmatprep.subr.mxu0 0.0
  %1781 = vmatpush1.msra.mxu0 0.0
  %1782 = vmatprep.subr.mxu0 0.0
  %1783 = vmatpush1.msra.mxu0 0.0
  %1784 = vmatprep.subr.mxu0 0.0
  %1785 = vmatpush1.msra.mxu0 0.0
  %1786 = vmatprep.subr.mxu0 0.0
  %1787 = vmatpush1.msra.mxu0 0.0
  %1788 = vmatprep.subr.mxu0 0.0
  %1789 = vmatpush1.msra.mxu0 0.0
  %1790 = vmatprep.subr.mxu0 0.0
  %1791 = vmatpush1.msra.mxu0 0.0
  %1792 = vmatprep.subr.mxu0 0.0
  %1793 = vmatpush1.msra.mxu0 0.0
  %1794 = vmatprep.mubr.f32.mxu0 0.0
  %1795 = vmatmul.mubr.f32.gmra.mrb[0].mxu0 %v1719
  %v1796 = vpop.f32.mrb[0].mxu0
  %v1797 = vadd.f32 %v1716, %v1796
  %v1798 = vpop.f32.mrb[0].mxu0
  %1799 = vmatprep.mubr.f32.mxu0 0.0
  %1800 = vmatmul.mubr.f32.gmra.mrb[0].mxu0 %v1722
  %v1801 = vpop.f32.mrb[0].mxu0
  %v1802 = vadd.f32 %v1716, %v1801
  %v1803 = vpop.f32.mrb[0].mxu0
  %1804 = vmatprep.mubr.f32.mxu0 0.0
  %1805 = vmatmul.mubr.f32.gmra.mrb[0].mxu0 %v1725
  %v1806 = vpop.f32.mrb[0].mxu0
  %v1807 = vadd.f32 %v1716, %v1806
  %v1808 = vpop.f32.mrb[0].mxu0
  %1809 = vmatprep.mubr.f32.mxu0 0.0
  %1810 = vmatmul.mubr.f32.gmra.mrb[0].mxu0 %v1728
  %v1811 = vpop.f32.mrb[0].mxu0
  %v1812 = vadd.f32 %v1716, %v1811
  %v1813 = vpop.f32.mrb[0].mxu0
  %1814 = vdwg.mxu0
  %1815 = vst [vmem:[%s9] sm:$0xff] %v1797
  %1816 = vst [vmem:[%s9 + $0x8] sm:$0xff] %v1802
  %1817 = vst [vmem:[%s9 + $0x10] sm:$0xff] %v1807
  %1818 = vst [vmem:[%s9 + $0x18] sm:$0xff] %v1812
  // Predicated region
  $region38: #{fsmn_sele_net_v2_forward.1} parent=0 // pred_check
    _
  $region39: #{fsmn_sele_net_v2_forward.1} parent=0 // pred_check_branch
    %1820 = sbr.rel (0) target = $region41
  $region40: #{fsmn_sele_net_v2_forward.1} parent=0 // pred_region
    _
  $region41: #{fsmn_sele_net_v2_forward.1} parent=0 // pred_fallthru
    _
  // Predicated region
  $region42: #{fsmn_sele_net_v2_forward.1} parent=0 // pred_check
    _
  $region43: #{fsmn_sele_net_v2_forward.1} parent=0 // pred_check_branch
    %1822 = sbr.rel (0) target = $region45
  $region44: #{fsmn_sele_net_v2_forward.1} parent=0 // pred_region
    _
  $region45: #{fsmn_sele_net_v2_forward.1} parent=0 // pred_fallthru
    _

</llo_original>
